<compile_context>
chip_gen: v6e
topology: v6e:2x2x1
jax: 0.10.0
libtpu: 0.0.40
codegen_flags: <defaults>
</compile_context>

<pallas_src>
import functools
import numpy as np
import jax
import jax.numpy as jnp
from jax import lax
from jax.experimental import pallas as pl
from jax.experimental.pallas import tpu as pltpu

# ----- config (matches REPLConfig(n_dim=64, n_head=4, ...)) -----
N_DIM = 64
N_HEAD = 4
HEAD_DIM = N_DIM // N_HEAD
FFN_HIDDEN = 4 * N_DIM          # SwiGLUFFN(n_dim, 4 * n_dim)
RMS_EPS = 1e-6                  # TODO(synk): exact eps of the custom RMSNorm not shown; using 1e-6
ROPE_BASE = 10000.0


def _encoder_block_kernel(x_ref, wqkv_ref, wo_ref, rms1_ref, rms2_ref,
                          w12_ref, w3_ref, cos_ref, sin_ref, bias_ref,
                          out_ref, *, batch):
    f32 = jnp.float32
    bf16 = jnp.bfloat16

    x = x_ref[...]                                   # (R, D), R = B*T (flattened batch)

    # ---- RMSNorm 1 (f32) ----
    ms = jnp.mean(x * x, axis=-1, keepdims=True)
    xr = x * lax.rsqrt(ms + RMS_EPS) * rms1_ref[...]
    xr_b = xr.astype(bf16)

    # ---- fused QKV + RoPE-rotated projections: ONE MXU matmul -> (R, 5*D) ----
    # Columns: [ q*scale | k | v | (q@P)*scale | k@P ]   (scale = 1/sqrt(head_dim), folded
    # into the bf16 weights on the host; 0.25 is a power of two -> lossless).
    qkv = jnp.dot(xr_b, wqkv_ref[...], preferred_element_type=f32)
    q_raw = qkv[:, 0 * N_DIM:1 * N_DIM]
    k_raw = qkv[:, 1 * N_DIM:2 * N_DIM]
    v     = qkv[:, 2 * N_DIM:3 * N_DIM]
    qP    = qkv[:, 3 * N_DIM:4 * N_DIM]
    kP    = qkv[:, 4 * N_DIM:5 * N_DIM]

    # ---- RoPE: x*cos + (x@P)*sin, P already folded into the fused weight ----
    cos_t = cos_ref[...]                             # (T, D)
    sin_t = sin_ref[...]
    if batch > 1:                                    # static tile across the flattened batch
        cos = jnp.concatenate([cos_t] * batch, axis=0)
        sin = jnp.concatenate([sin_t] * batch, axis=0)
    else:
        cos, sin = cos_t, sin_t

    q = q_raw * cos + qP * sin                       # score scale already folded in
    k = k_raw * cos + kP * sin

    # ---- multi-head causal attention over the flattened batch ----
    bias = bias_ref[...]                             # (R, R) additive 0 / -1e30 block-diag causal
    qb = q.astype(bf16)
    kb = k.astype(bf16)
    vb = v.astype(bf16)

    qkT_dims = (((1,), (1,)), ((), ()))              # contract last dims: q @ k^T
    heads = []
    for h in range(N_HEAD):                          # static unroll over 4 heads
        sl = slice(h * HEAD_DIM, (h + 1) * HEAD_DIM)
        s = lax.dot_general(qb[:, sl], kb[:, sl], qkT_dims,
                            preferred_element_type=f32) + bias
        m = jnp.max(s, axis=-1, keepdims=True)
        p = jnp.exp(s - m)
        p = p * pl.reciprocal(jnp.sum(p, axis=-1, keepdims=True), approx=True)
        heads.append(jnp.dot(p.astype(bf16), vb[:, sl], preferred_element_type=f32))

    # Single output projection: lane-concat the head outputs (all inside one 128-lane tile),
    # then ONE (R,64)@(64,64) matmul instead of 4 accumulated pushes.
    o = jnp.concatenate(heads, axis=-1)              # (R, D)
    y = jnp.dot(o.astype(bf16), wo_ref[...], preferred_element_type=f32)

    # ---- residual 1 (residual base is the NORMED x, as in the PyTorch forward) ----
    x1 = xr + y

    # ---- RMSNorm 2 + SwiGLU FFN (W1/W2 fused; split at lane-aligned column 256) ----
    ms2 = jnp.mean(x1 * x1, axis=-1, keepdims=True)
    xn = (x1 * lax.rsqrt(ms2 + RMS_EPS) * rms2_ref[...]).astype(bf16)
    gu = jnp.dot(xn, w12_ref[...], preferred_element_type=f32)       # (R, 2*FFN_HIDDEN)
    g = gu[:, :FFN_HIDDEN]
    u = gu[:, FFN_HIDDEN:]
    h_sw = (g * jax.nn.sigmoid(g)) * u
    ff = jnp.dot(h_sw.astype(bf16), w3_ref[...], preferred_element_type=f32)

    # Single (R, D) f32 store.
    out_ref[...] = x1 + ff


def encoder_block(x, params, cos_t, sin_t, rot_mat):
    B, T, D = x.shape
    R = B * T
    F = FFN_HIDDEN
    xf = x.reshape(R, D)                             # flattened batch, single invocation

    # Fold RoPE pair-rotation matrix P and the score scale into the projection weights (host).
    scale = 1.0 / (HEAD_DIM ** 0.5)                  # 0.25 (power of two -> exact in bf16)
    wq, wk, wv, wo = params["wq"], params["wk"], params["wv"], params["wo"]
    wqkv = jnp.concatenate(
        [wq * scale, wk, wv, (wq @ rot_mat) * scale, wk @ rot_mat], axis=1)   # (D, 5D)
    w12 = jnp.concatenate([params["w1"], params["w2"]], axis=1)               # (D, 2F)

    # Block-diagonal causal mask as an additive 0 / -1e30 bias (host precomputed).
    idx = np.arange(R)
    allowed = (idx[:, None] // T == idx[None, :] // T) & (idx[None, :] <= idx[:, None])
    bias = jnp.asarray(np.where(allowed, 0.0, -1e30).astype(np.float32))      # (R, R)

    bf = lambda w: w.astype(jnp.bfloat16)
    args = (xf, bf(wqkv), bf(wo), params["rms1"], params["rms2"],
            bf(w12), bf(params["w3"]), cos_t, sin_t, bias)

    flops = (2 * R * D * (5 * D)                     # fused QKV + RoPE projections
             + N_HEAD * 2 * (2 * R * R * HEAD_DIM)   # scores + p@v
             + 2 * R * D * D                         # output projection
             + 2 * R * D * (2 * F) + 2 * R * F * D)  # SwiGLU FFN
    transcendentals = N_HEAD * R * R + R * F + 2 * R + N_HEAD * R
    bytes_accessed = int(sum(int(np.prod(a.shape)) * a.dtype.itemsize for a in args)
                         + R * D * 4)

    vmem_spec = pl.BlockSpec(memory_space=pltpu.MemorySpace.VMEM)
    out = pl.pallas_call(
        functools.partial(_encoder_block_kernel, batch=B),
        out_shape=jax.ShapeDtypeStruct((R, D), jnp.float32),
        in_specs=[vmem_spec] * len(args),
        out_specs=vmem_spec,
        cost_estimate=pl.CostEstimate(flops=int(flops),
                                      transcendentals=int(transcendentals),
                                      bytes_accessed=bytes_accessed),
    )(*args)
    return out.reshape(B, T, D)


# ---------------- glue: parameters, RoPE tables, reference ----------------

def make_params(key):
    ks = jax.random.split(key, 7)
    scale = 0.02
    # PyTorch nn.Linear weights are (out, in); stored pre-transposed to (in, out).
    return {
        "wq": scale * jax.random.normal(ks[0], (N_DIM, N_DIM), jnp.float32),
        "wk": scale * jax.random.normal(ks[1], (N_DIM, N_DIM), jnp.float32),
        "wv": scale * jax.random.normal(ks[2], (N_DIM, N_DIM), jnp.float32),
        "wo": scale * jax.random.normal(ks[3], (N_DIM, N_DIM), jnp.float32),
        "rms1": jnp.ones((1, N_DIM), jnp.float32),
        "rms2": jnp.ones((1, N_DIM), jnp.float32),
        # TODO(synk): SwiGLUFFN internals not shown; standard w1/w2 (gate/up) -> w3, hidden=4*n_dim
        "w1": scale * jax.random.normal(ks[4], (N_DIM, FFN_HIDDEN), jnp.float32),
        "w2": scale * jax.random.normal(ks[5], (N_DIM, FFN_HIDDEN), jnp.float32),
        "w3": scale * jax.random.normal(ks[6], (FFN_HIDDEN, N_DIM), jnp.float32),
    }


def make_rope_tables(seq_len):
    # torchtune interleaved-pair RoPE, duplicated per pair and tiled across heads.
    inv_freq = 1.0 / (ROPE_BASE ** (np.arange(0, HEAD_DIM, 2, dtype=np.float64) / HEAD_DIM))
    pos = np.arange(seq_len, dtype=np.float64)
    ang = pos[:, None] * inv_freq[None, :]                       # (T, hd/2)
    cos_hd = np.repeat(np.cos(ang), 2, axis=-1)                  # (T, hd) interleaved
    sin_hd = np.repeat(np.sin(ang), 2, axis=-1)
    cos_t = np.tile(cos_hd, (1, N_HEAD)).astype(np.float32)      # (T, D)
    sin_t = np.tile(sin_hd, (1, N_HEAD)).astype(np.float32)
    # Pair-rotation matrix: (x @ P)[2i] = -x[2i+1], (x @ P)[2i+1] = x[2i]
    P = np.zeros((N_DIM, N_DIM), np.float32)
    for j in range(0, N_DIM, 2):
        P[j + 1, j] = -1.0
        P[j, j + 1] = 1.0
    return jnp.asarray(cos_t), jnp.asarray(sin_t), jnp.asarray(P)


def reference_encoder_block(x, p, cos_t, sin_t, P):
    def rms(z, w):
        return z * jax.lax.rsqrt(jnp.mean(z * z, -1, keepdims=True) + RMS_EPS) * w
    xr = rms(x, p["rms1"])
    q = xr @ p["wq"]; k = xr @ p["wk"]; v = xr @ p["wv"]
    q = q * cos_t + (q @ P) * sin_t                  # (T,D) tables broadcast over batch
    k = k * cos_t + (k @ P) * sin_t
    B, T, D = x.shape
    qh = q.reshape(B, T, N_HEAD, HEAD_DIM).transpose(0, 2, 1, 3)
    kh = k.reshape(B, T, N_HEAD, HEAD_DIM).transpose(0, 2, 1, 3)
    vh = v.reshape(B, T, N_HEAD, HEAD_DIM).transpose(0, 2, 1, 3)
    s = jnp.einsum("bhqd,bhkd->bhqk", qh, kh) / (HEAD_DIM ** 0.5)
    mask = jnp.tril(jnp.ones((T, T), bool))
    s = jnp.where(mask, s, -jnp.inf)
    pattn = jax.nn.softmax(s, axis=-1)
    o = jnp.einsum("bhqk,bhkd->bhqd", pattn, vh).transpose(0, 2, 1, 3).reshape(B, T, D)
    y = o @ p["wo"]
    x1 = xr + y
    xn = rms(x1, p["rms2"])
    ff = (jax.nn.silu(xn @ p["w1"]) * (xn @ p["w2"])) @ p["w3"]
    return x1 + ff


if __name__ == "__main__":
    B, T = 2, 8
    key = jax.random.PRNGKey(0)
    kx, kp = jax.random.split(key)
    x = jax.random.normal(kx, (B, T, N_DIM), jnp.float32)
    params = make_params(kp)
    cos_t, sin_t, rot_mat = make_rope_tables(T)

    out = encoder_block(x, params, cos_t, sin_t, rot_mat)
    out = jax.block_until_ready(out)

    ref = reference_encoder_block(x, params, cos_t, sin_t, rot_mat)
    # Kernel runs matmul operands in bf16 (f32 accumulation) + approx reciprocal in softmax;
    # reference is pure f32, so the comparison tolerance is loosened accordingly.
    np.testing.assert_allclose(np.asarray(out), np.asarray(ref), rtol=2e-2, atol=2e-2)

    print("KERNEL_OK")
</pallas_src>

<mosaic_0001>
module attributes {stable_mosaic.version = 11 : i64} {
  func.func @_encoder_block_kernel(%arg0: memref<16x64xf32, #tpu.memory_space<vmem>>, %arg1: memref<64x320xbf16, #tpu.memory_space<vmem>>, %arg2: memref<64x64xbf16, #tpu.memory_space<vmem>>, %arg3: memref<1x64xf32, #tpu.memory_space<vmem>>, %arg4: memref<1x64xf32, #tpu.memory_space<vmem>>, %arg5: memref<64x512xbf16, #tpu.memory_space<vmem>>, %arg6: memref<256x64xbf16, #tpu.memory_space<vmem>>, %arg7: memref<8x64xf32, #tpu.memory_space<vmem>>, %arg8: memref<8x64xf32, #tpu.memory_space<vmem>>, %arg9: memref<16x16xf32, #tpu.memory_space<vmem>>, %arg10: memref<16x64xf32, #tpu.memory_space<vmem>>) attributes {dimension_semantics = [], scalar_prefetch = 0 : i64, scratch_operands = 0 : i64, tpu.core_type = #tpu.core_type<tc>} {
    %c0 = arith.constant 0 : index
    %c0_0 = arith.constant 0 : index
    %0 = vector.load %arg0[%c0, %c0_0] : memref<16x64xf32, #tpu.memory_space<vmem>>, vector<16x64xf32>
    %1 = arith.mulf %0, %0 : vector<16x64xf32>
    %cst = arith.constant dense<0.000000e+00> : vector<16xf32>
    %2 = vector.multi_reduction <add>, %1, %cst [1] : vector<16x64xf32> to vector<16xf32>
    %3 = vector.shape_cast %2 : vector<16xf32> to vector<16x1xf32>
    %cst_1 = arith.constant 6.400000e+01 : f32
    %4 = vector.broadcast %cst_1 : f32 to vector<16x1xf32>
    %5 = arith.divf %3, %4 : vector<16x1xf32>
    %cst_2 = arith.constant 9.99999997E-7 : f32
    %6 = vector.broadcast %cst_2 : f32 to vector<16x1xf32>
    %7 = arith.addf %5, %6 : vector<16x1xf32>
    %8 = math.rsqrt %7 : vector<16x1xf32>
    %9 = vector.broadcast %8 : vector<16x1xf32> to vector<16x64xf32>
    %10 = arith.mulf %0, %9 : vector<16x64xf32>
    %c0_3 = arith.constant 0 : index
    %c0_4 = arith.constant 0 : index
    %11 = vector.load %arg3[%c0_3, %c0_4] : memref<1x64xf32, #tpu.memory_space<vmem>>, vector<1x64xf32>
    %12 = vector.broadcast %11 : vector<1x64xf32> to vector<16x64xf32>
    %13 = arith.mulf %10, %12 : vector<16x64xf32>
    %14 = arith.truncf %13 : vector<16x64xf32> to vector<16x64xbf16>
    %c0_5 = arith.constant 0 : index
    %c0_6 = arith.constant 0 : index
    %15 = vector.load %arg1[%c0_5, %c0_6] : memref<64x320xbf16, #tpu.memory_space<vmem>>, vector<64x320xbf16>
    %cst_7 = arith.constant dense<0.000000e+00> : vector<16x320xf32>
    %16 = tpu.matmul %14, %15, %cst_7 {dimension_numbers = #tpu.dot_dimension_numbers<[1], [0], [0], [1], [0, 0, 1, 1], [], []>} : vector<16x64xbf16>, vector<64x320xbf16>, vector<16x320xf32> -> vector<16x320xf32>
    %17 = vector.extract_strided_slice %16 {offsets = [0, 0], sizes = [16, 64], strides = [1, 1]} : vector<16x320xf32> to vector<16x64xf32>
    %18 = vector.extract_strided_slice %16 {offsets = [0, 64], sizes = [16, 64], strides = [1, 1]} : vector<16x320xf32> to vector<16x64xf32>
    %19 = vector.extract_strided_slice %16 {offsets = [0, 128], sizes = [16, 64], strides = [1, 1]} : vector<16x320xf32> to vector<16x64xf32>
    %20 = vector.extract_strided_slice %16 {offsets = [0, 192], sizes = [16, 64], strides = [1, 1]} : vector<16x320xf32> to vector<16x64xf32>
    %21 = vector.extract_strided_slice %16 {offsets = [0, 256], sizes = [16, 64], strides = [1, 1]} : vector<16x320xf32> to vector<16x64xf32>
    %c0_8 = arith.constant 0 : index
    %c0_9 = arith.constant 0 : index
    %22 = vector.load %arg7[%c0_8, %c0_9] : memref<8x64xf32, #tpu.memory_space<vmem>>, vector<8x64xf32>
    %c0_10 = arith.constant 0 : index
    %c0_11 = arith.constant 0 : index
    %23 = vector.load %arg8[%c0_10, %c0_11] : memref<8x64xf32, #tpu.memory_space<vmem>>, vector<8x64xf32>
    %24 = tpu.concatenate %22, %22 in 0 : vector<8x64xf32>, vector<8x64xf32> -> vector<16x64xf32>
    %25 = tpu.concatenate %23, %23 in 0 : vector<8x64xf32>, vector<8x64xf32> -> vector<16x64xf32>
    %26 = arith.mulf %17, %24 : vector<16x64xf32>
    %27 = arith.mulf %20, %25 : vector<16x64xf32>
    %28 = arith.addf %26, %27 : vector<16x64xf32>
    %29 = arith.mulf %18, %24 : vector<16x64xf32>
    %30 = arith.mulf %21, %25 : vector<16x64xf32>
    %31 = arith.addf %29, %30 : vector<16x64xf32>
    %c0_12 = arith.constant 0 : index
    %c0_13 = arith.constant 0 : index
    %32 = vector.load %arg9[%c0_12, %c0_13] : memref<16x16xf32, #tpu.memory_space<vmem>>, vector<16x16xf32>
    %33 = arith.truncf %28 : vector<16x64xf32> to vector<16x64xbf16>
    %34 = arith.truncf %31 : vector<16x64xf32> to vector<16x64xbf16>
    %35 = arith.truncf %19 : vector<16x64xf32> to vector<16x64xbf16>
    %36 = vector.extract_strided_slice %33 {offsets = [0, 0], sizes = [16, 16], strides = [1, 1]} : vector<16x64xbf16> to vector<16x16xbf16>
    %37 = vector.extract_strided_slice %34 {offsets = [0, 0], sizes = [16, 16], strides = [1, 1]} : vector<16x64xbf16> to vector<16x16xbf16>
    %cst_14 = arith.constant dense<0.000000e+00> : vector<16x16xf32>
    %38 = tpu.matmul %36, %37, %cst_14 {dimension_numbers = #tpu.dot_dimension_numbers<[1], [1], [0], [0], [0, 0, 1, 0], [], []>} : vector<16x16xbf16>, vector<16x16xbf16>, vector<16x16xf32> -> vector<16x16xf32>
    %39 = arith.addf %38, %32 : vector<16x16xf32>
    %cst_15 = arith.constant dense<0xFF800000> : vector<16xf32>
    %40 = vector.multi_reduction <maximumf>, %39, %cst_15 [1] : vector<16x16xf32> to vector<16xf32>
    %41 = vector.shape_cast %40 : vector<16xf32> to vector<16x1xf32>
    %42 = vector.broadcast %41 : vector<16x1xf32> to vector<16x16xf32>
    %43 = arith.subf %39, %42 : vector<16x16xf32>
    %44 = math.exp %43 : vector<16x16xf32>
    %cst_16 = arith.constant dense<0.000000e+00> : vector<16xf32>
    %45 = vector.multi_reduction <add>, %44, %cst_16 [1] : vector<16x16xf32> to vector<16xf32>
    %46 = vector.shape_cast %45 : vector<16xf32> to vector<16x1xf32>
    %47 = tpu.reciprocal %46 {approx = true} : vector<16x1xf32> -> vector<16x1xf32>
    %48 = vector.broadcast %47 : vector<16x1xf32> to vector<16x16xf32>
    %49 = arith.mulf %44, %48 : vector<16x16xf32>
    %50 = arith.truncf %49 : vector<16x16xf32> to vector<16x16xbf16>
    %51 = vector.extract_strided_slice %35 {offsets = [0, 0], sizes = [16, 16], strides = [1, 1]} : vector<16x64xbf16> to vector<16x16xbf16>
    %cst_17 = arith.constant dense<0.000000e+00> : vector<16x16xf32>
    %52 = tpu.matmul %50, %51, %cst_17 {dimension_numbers = #tpu.dot_dimension_numbers<[1], [0], [0], [1], [0, 0, 1, 1], [], []>} : vector<16x16xbf16>, vector<16x16xbf16>, vector<16x16xf32> -> vector<16x16xf32>
    %53 = vector.extract_strided_slice %33 {offsets = [0, 16], sizes = [16, 16], strides = [1, 1]} : vector<16x64xbf16> to vector<16x16xbf16>
    %54 = vector.extract_strided_slice %34 {offsets = [0, 16], sizes = [16, 16], strides = [1, 1]} : vector<16x64xbf16> to vector<16x16xbf16>
    %cst_18 = arith.constant dense<0.000000e+00> : vector<16x16xf32>
    %55 = tpu.matmul %53, %54, %cst_18 {dimension_numbers = #tpu.dot_dimension_numbers<[1], [1], [0], [0], [0, 0, 1, 0], [], []>} : vector<16x16xbf16>, vector<16x16xbf16>, vector<16x16xf32> -> vector<16x16xf32>
    %56 = arith.addf %55, %32 : vector<16x16xf32>
    %cst_19 = arith.constant dense<0xFF800000> : vector<16xf32>
    %57 = vector.multi_reduction <maximumf>, %56, %cst_19 [1] : vector<16x16xf32> to vector<16xf32>
    %58 = vector.shape_cast %57 : vector<16xf32> to vector<16x1xf32>
    %59 = vector.broadcast %58 : vector<16x1xf32> to vector<16x16xf32>
    %60 = arith.subf %56, %59 : vector<16x16xf32>
    %61 = math.exp %60 : vector<16x16xf32>
    %cst_20 = arith.constant dense<0.000000e+00> : vector<16xf32>
    %62 = vector.multi_reduction <add>, %61, %cst_20 [1] : vector<16x16xf32> to vector<16xf32>
    %63 = vector.shape_cast %62 : vector<16xf32> to vector<16x1xf32>
    %64 = tpu.reciprocal %63 {approx = true} : vector<16x1xf32> -> vector<16x1xf32>
    %65 = vector.broadcast %64 : vector<16x1xf32> to vector<16x16xf32>
    %66 = arith.mulf %61, %65 : vector<16x16xf32>
    %67 = arith.truncf %66 : vector<16x16xf32> to vector<16x16xbf16>
    %68 = vector.extract_strided_slice %35 {offsets = [0, 16], sizes = [16, 16], strides = [1, 1]} : vector<16x64xbf16> to vector<16x16xbf16>
    %cst_21 = arith.constant dense<0.000000e+00> : vector<16x16xf32>
    %69 = tpu.matmul %67, %68, %cst_21 {dimension_numbers = #tpu.dot_dimension_numbers<[1], [0], [0], [1], [0, 0, 1, 1], [], []>} : vector<16x16xbf16>, vector<16x16xbf16>, vector<16x16xf32> -> vector<16x16xf32>
    %70 = vector.extract_strided_slice %33 {offsets = [0, 32], sizes = [16, 16], strides = [1, 1]} : vector<16x64xbf16> to vector<16x16xbf16>
    %71 = vector.extract_strided_slice %34 {offsets = [0, 32], sizes = [16, 16], strides = [1, 1]} : vector<16x64xbf16> to vector<16x16xbf16>
    %cst_22 = arith.constant dense<0.000000e+00> : vector<16x16xf32>
    %72 = tpu.matmul %70, %71, %cst_22 {dimension_numbers = #tpu.dot_dimension_numbers<[1], [1], [0], [0], [0, 0, 1, 0], [], []>} : vector<16x16xbf16>, vector<16x16xbf16>, vector<16x16xf32> -> vector<16x16xf32>
    %73 = arith.addf %72, %32 : vector<16x16xf32>
    %cst_23 = arith.constant dense<0xFF800000> : vector<16xf32>
    %74 = vector.multi_reduction <maximumf>, %73, %cst_23 [1] : vector<16x16xf32> to vector<16xf32>
    %75 = vector.shape_cast %74 : vector<16xf32> to vector<16x1xf32>
    %76 = vector.broadcast %75 : vector<16x1xf32> to vector<16x16xf32>
    %77 = arith.subf %73, %76 : vector<16x16xf32>
    %78 = math.exp %77 : vector<16x16xf32>
    %cst_24 = arith.constant dense<0.000000e+00> : vector<16xf32>
    %79 = vector.multi_reduction <add>, %78, %cst_24 [1] : vector<16x16xf32> to vector<16xf32>
    %80 = vector.shape_cast %79 : vector<16xf32> to vector<16x1xf32>
    %81 = tpu.reciprocal %80 {approx = true} : vector<16x1xf32> -> vector<16x1xf32>
    %82 = vector.broadcast %81 : vector<16x1xf32> to vector<16x16xf32>
    %83 = arith.mulf %78, %82 : vector<16x16xf32>
    %84 = arith.truncf %83 : vector<16x16xf32> to vector<16x16xbf16>
    %85 = vector.extract_strided_slice %35 {offsets = [0, 32], sizes = [16, 16], strides = [1, 1]} : vector<16x64xbf16> to vector<16x16xbf16>
    %cst_25 = arith.constant dense<0.000000e+00> : vector<16x16xf32>
    %86 = tpu.matmul %84, %85, %cst_25 {dimension_numbers = #tpu.dot_dimension_numbers<[1], [0], [0], [1], [0, 0, 1, 1], [], []>} : vector<16x16xbf16>, vector<16x16xbf16>, vector<16x16xf32> -> vector<16x16xf32>
    %87 = vector.extract_strided_slice %33 {offsets = [0, 48], sizes = [16, 16], strides = [1, 1]} : vector<16x64xbf16> to vector<16x16xbf16>
    %88 = vector.extract_strided_slice %34 {offsets = [0, 48], sizes = [16, 16], strides = [1, 1]} : vector<16x64xbf16> to vector<16x16xbf16>
    %cst_26 = arith.constant dense<0.000000e+00> : vector<16x16xf32>
    %89 = tpu.matmul %87, %88, %cst_26 {dimension_numbers = #tpu.dot_dimension_numbers<[1], [1], [0], [0], [0, 0, 1, 0], [], []>} : vector<16x16xbf16>, vector<16x16xbf16>, vector<16x16xf32> -> vector<16x16xf32>
    %90 = arith.addf %89, %32 : vector<16x16xf32>
    %cst_27 = arith.constant dense<0xFF800000> : vector<16xf32>
    %91 = vector.multi_reduction <maximumf>, %90, %cst_27 [1] : vector<16x16xf32> to vector<16xf32>
    %92 = vector.shape_cast %91 : vector<16xf32> to vector<16x1xf32>
    %93 = vector.broadcast %92 : vector<16x1xf32> to vector<16x16xf32>
    %94 = arith.subf %90, %93 : vector<16x16xf32>
    %95 = math.exp %94 : vector<16x16xf32>
    %cst_28 = arith.constant dense<0.000000e+00> : vector<16xf32>
    %96 = vector.multi_reduction <add>, %95, %cst_28 [1] : vector<16x16xf32> to vector<16xf32>
    %97 = vector.shape_cast %96 : vector<16xf32> to vector<16x1xf32>
    %98 = tpu.reciprocal %97 {approx = true} : vector<16x1xf32> -> vector<16x1xf32>
    %99 = vector.broadcast %98 : vector<16x1xf32> to vector<16x16xf32>
    %100 = arith.mulf %95, %99 : vector<16x16xf32>
    %101 = arith.truncf %100 : vector<16x16xf32> to vector<16x16xbf16>
    %102 = vector.extract_strided_slice %35 {offsets = [0, 48], sizes = [16, 16], strides = [1, 1]} : vector<16x64xbf16> to vector<16x16xbf16>
    %cst_29 = arith.constant dense<0.000000e+00> : vector<16x16xf32>
    %103 = tpu.matmul %101, %102, %cst_29 {dimension_numbers = #tpu.dot_dimension_numbers<[1], [0], [0], [1], [0, 0, 1, 1], [], []>} : vector<16x16xbf16>, vector<16x16xbf16>, vector<16x16xf32> -> vector<16x16xf32>
    %104 = tpu.concatenate %52, %69, %86, %103 in 1 : vector<16x16xf32>, vector<16x16xf32>, vector<16x16xf32>, vector<16x16xf32> -> vector<16x64xf32>
    %105 = arith.truncf %104 : vector<16x64xf32> to vector<16x64xbf16>
    %c0_30 = arith.constant 0 : index
    %c0_31 = arith.constant 0 : index
    %106 = vector.load %arg2[%c0_30, %c0_31] : memref<64x64xbf16, #tpu.memory_space<vmem>>, vector<64x64xbf16>
    %cst_32 = arith.constant dense<0.000000e+00> : vector<16x64xf32>
    %107 = tpu.matmul %105, %106, %cst_32 {dimension_numbers = #tpu.dot_dimension_numbers<[1], [0], [0], [1], [0, 0, 1, 1], [], []>} : vector<16x64xbf16>, vector<64x64xbf16>, vector<16x64xf32> -> vector<16x64xf32>
    %108 = arith.addf %13, %107 : vector<16x64xf32>
    %109 = arith.mulf %108, %108 : vector<16x64xf32>
    %cst_33 = arith.constant dense<0.000000e+00> : vector<16xf32>
    %110 = vector.multi_reduction <add>, %109, %cst_33 [1] : vector<16x64xf32> to vector<16xf32>
    %111 = vector.shape_cast %110 : vector<16xf32> to vector<16x1xf32>
    %cst_34 = arith.constant 6.400000e+01 : f32
    %112 = vector.broadcast %cst_34 : f32 to vector<16x1xf32>
    %113 = arith.divf %111, %112 : vector<16x1xf32>
    %cst_35 = arith.constant 9.99999997E-7 : f32
    %114 = vector.broadcast %cst_35 : f32 to vector<16x1xf32>
    %115 = arith.addf %113, %114 : vector<16x1xf32>
    %116 = math.rsqrt %115 : vector<16x1xf32>
    %117 = vector.broadcast %116 : vector<16x1xf32> to vector<16x64xf32>
    %118 = arith.mulf %108, %117 : vector<16x64xf32>
    %c0_36 = arith.constant 0 : index
    %c0_37 = arith.constant 0 : index
    %119 = vector.load %arg4[%c0_36, %c0_37] : memref<1x64xf32, #tpu.memory_space<vmem>>, vector<1x64xf32>
    %120 = vector.broadcast %119 : vector<1x64xf32> to vector<16x64xf32>
    %121 = arith.mulf %118, %120 : vector<16x64xf32>
    %122 = arith.truncf %121 : vector<16x64xf32> to vector<16x64xbf16>
    %c0_38 = arith.constant 0 : index
    %c0_39 = arith.constant 0 : index
    %123 = vector.load %arg5[%c0_38, %c0_39] : memref<64x512xbf16, #tpu.memory_space<vmem>>, vector<64x512xbf16>
    %cst_40 = arith.constant dense<0.000000e+00> : vector<16x512xf32>
    %124 = tpu.matmul %122, %123, %cst_40 {dimension_numbers = #tpu.dot_dimension_numbers<[1], [0], [0], [1], [0, 0, 1, 1], [], []>} : vector<16x64xbf16>, vector<64x512xbf16>, vector<16x512xf32> -> vector<16x512xf32>
    %125 = vector.extract_strided_slice %124 {offsets = [0, 0], sizes = [16, 256], strides = [1, 1]} : vector<16x512xf32> to vector<16x256xf32>
    %126 = vector.extract_strided_slice %124 {offsets = [0, 256], sizes = [16, 256], strides = [1, 1]} : vector<16x512xf32> to vector<16x256xf32>
    %127 = arith.negf %125 : vector<16x256xf32>
    %128 = math.exp %127 : vector<16x256xf32>
    %cst_41 = arith.constant 1.000000e+00 : f32
    %129 = vector.broadcast %cst_41 : f32 to vector<16x256xf32>
    %130 = arith.addf %129, %128 : vector<16x256xf32>
    %131 = arith.divf %129, %130 : vector<16x256xf32>
    %132 = arith.mulf %125, %131 : vector<16x256xf32>
    %133 = arith.mulf %132, %126 : vector<16x256xf32>
    %134 = arith.truncf %133 : vector<16x256xf32> to vector<16x256xbf16>
    %c0_42 = arith.constant 0 : index
    %c0_43 = arith.constant 0 : index
    %135 = vector.load %arg6[%c0_42, %c0_43] : memref<256x64xbf16, #tpu.memory_space<vmem>>, vector<256x64xbf16>
    %cst_44 = arith.constant dense<0.000000e+00> : vector<16x64xf32>
    %136 = tpu.matmul %134, %135, %cst_44 {dimension_numbers = #tpu.dot_dimension_numbers<[1], [0], [0], [1], [0, 0, 1, 1], [], []>} : vector<16x256xbf16>, vector<256x64xbf16>, vector<16x64xf32> -> vector<16x64xf32>
    %137 = arith.addf %108, %136 : vector<16x64xf32>
    %c0_45 = arith.constant 0 : index
    %c0_46 = arith.constant 0 : index
    %138 = vector.load %arg10[%c0_45, %c0_46] : memref<16x64xf32, #tpu.memory_space<vmem>>, vector<16x64xf32>
    tpu.vector_store %arg10[%c0_45, %c0_46], %137 {strides = array<i32>} : memref<16x64xf32, #tpu.memory_space<vmem>>, vector<16x64xf32>,
    return
  }
}

</mosaic_0001>

<llo_original>
// kernel: tpu_custom_call.1
$region0: #{tpu_custom_call.1}
  #allocation0 [shape = 'u32[]', space=smem, size = 0x4, offset = 0x4, fixed_abs, tag = 'smem constant byte address 0x4 - core index']
  #allocation1 [shape = 'u32[144,128]{1,0:T(1,128)}', space=vmem, size = 0x12000, scoped, tag = 'internal scratch']
  %s0 = inlined_call_operand.vmem [shape: f32[16,64], index: 0, kind: input, shape index: {}]
  %s1 = inlined_call_operand.hbm [shape: bf16[64,320], index: 1, kind: input, shape index: {}]
  %s2 = inlined_call_operand.vmem [shape: bf16[64,64], index: 2, kind: input, shape index: {}]
  %s3 = inlined_call_operand.vmem [shape: f32[1,64], index: 3, kind: input, shape index: {}]
  %s4 = inlined_call_operand.hbm [shape: f32[1,64], index: 4, kind: input, shape index: {}]
  %s5 = inlined_call_operand.vmem [shape: bf16[64,512], index: 5, kind: input, shape index: {}]
  %s6 = inlined_call_operand.vmem [shape: bf16[256,64], index: 6, kind: input, shape index: {}]
  %s7 = inlined_call_operand.vmem [shape: f32[8,64], index: 7, kind: input, shape index: {}]
  %s8 = inlined_call_operand.hbm [shape: f32[8,64], index: 8, kind: input, shape index: {}]
  %s9 = inlined_call_operand.vmem [shape: f32[16,16], index: 9, kind: input, shape index: {}]
  %s10 = inlined_call_operand.hbm [shape: f32[16,64], index: 10, kind: output, shape index: {}]
  %s11 = sld [smem:[#allocation0]]
  $region62: #{tpu_custom_call.1} parent=0
    _
  %s13 = ssub.s32 1, %s11
  %s14 = scalar_select 0, %s13, %s11
  $region1: #{tpu_custom_call.1} parent=0
    #allocation2 [shape = 'u8[49152]{0}', space=vmem, size = 0xc000, scoped, tag = 'input window, operand 1, single buffered']
    #allocation3 [shape = 's32[1]{0}', space=sflag, size = 0x4, scoped, tag = 'scoped memory for tpu_custom_call.1']
    #allocation4 [shape = 's32[1]{0}', space=sflag, size = 0x4, scoped, tag = 'scoped memory for tpu_custom_call.1']
    #allocation5 [shape = 'u8[512]{0}', space=vmem, size = 0x400, scoped, tag = 'input window, operand 4, single buffered']
    #allocation6 [shape = 's32[1]{0}', space=sflag, size = 0x4, scoped, tag = 'scoped memory for tpu_custom_call.1']
    #allocation7 [shape = 'u8[4096]{0}', space=vmem, size = 0x1000, scoped, tag = 'input window, operand 8, single buffered']
    #allocation8 [shape = 'u8[8192]{0}', space=vmem, size = 0x2000, scoped, tag = 'output window, operand 0, single buffered']
    %15 = vsyncpa [#allocation3], 0
    %16 = vsyncpa [#allocation6], 0
    %17 = vsyncpa [#allocation4], 0
    // Predicated region
    $region2: #{tpu_custom_call.1} parent=1 // pred_check
      _
    $region3: #{tpu_custom_call.1} parent=1 // pred_check_branch
      %19 = sbr.rel (0) target = $region5
    $region4: #{tpu_custom_call.1} parent=1 // pred_region
      _
    $region5: #{tpu_custom_call.1} parent=1 // pred_fallthru
      _
    // Predicated region
    $region6: #{tpu_custom_call.1} parent=1 // pred_check
      _
    $region7: #{tpu_custom_call.1} parent=1 // pred_check_branch
      %21 = sbr.rel (0) target = $region9
    $region8: #{tpu_custom_call.1} parent=1 // pred_region
      %s23 = ssub.s32 1536, 1536
      %24 = vsyncadd [#allocation3], %s23
      %s25 = sshll.u32 [#allocation2], 4
      %s26 = int_to_ptr.vmem [resolvable:$true] %s25
      %31 = dma.hbm_to_vmem [thread:$0]  %s1, 1536, %s26, [#allocation3], 192, 192, 12
    $region9: #{tpu_custom_call.1} parent=1 // pred_fallthru
      _
    // Predicated region
    $region10: #{tpu_custom_call.1} parent=1 // pred_check
      _
    $region11: #{tpu_custom_call.1} parent=1 // pred_check_branch
      %33 = sbr.rel (0) target = $region13
    $region12: #{tpu_custom_call.1} parent=1 // pred_region
      _
    $region13: #{tpu_custom_call.1} parent=1 // pred_fallthru
      _
    // Predicated region
    $region14: #{tpu_custom_call.1} parent=1 // pred_check
      _
    $region15: #{tpu_custom_call.1} parent=1 // pred_check_branch
      %35 = sbr.rel (0) target = $region17
    $region16: #{tpu_custom_call.1} parent=1 // pred_region
      _
    $region17: #{tpu_custom_call.1} parent=1 // pred_fallthru
      _
    // Predicated region
    $region18: #{tpu_custom_call.1} parent=1 // pred_check
      _
    $region19: #{tpu_custom_call.1} parent=1 // pred_check_branch
      %37 = sbr.rel (0) target = $region21
    $region20: #{tpu_custom_call.1} parent=1 // pred_region
      %s39 = ssub.s32 16, 16
      %40 = vsyncadd [#allocation6], %s39
      %s42 = sshll.u32 [#allocation5], 4
      %s43 = int_to_ptr.vmem [resolvable:$true] %s42
      %45 = dma.hbm_to_vmem [thread:$0]  %s4, 16, %s43, [#allocation6]
    $region21: #{tpu_custom_call.1} parent=1 // pred_fallthru
      _
    // Predicated region
    $region22: #{tpu_custom_call.1} parent=1 // pred_check
      _
    $region23: #{tpu_custom_call.1} parent=1 // pred_check_branch
      %47 = sbr.rel (0) target = $region25
    $region24: #{tpu_custom_call.1} parent=1 // pred_region
      _
    $region25: #{tpu_custom_call.1} parent=1 // pred_fallthru
      _
    // Predicated region
    $region26: #{tpu_custom_call.1} parent=1 // pred_check
      _
    $region27: #{tpu_custom_call.1} parent=1 // pred_check_branch
      %49 = sbr.rel (0) target = $region29
    $region28: #{tpu_custom_call.1} parent=1 // pred_region
      _
    $region29: #{tpu_custom_call.1} parent=1 // pred_fallthru
      _
    // Predicated region
    $region30: #{tpu_custom_call.1} parent=1 // pred_check
      _
    $region31: #{tpu_custom_call.1} parent=1 // pred_check_branch
      %51 = sbr.rel (0) target = $region33
    $region32: #{tpu_custom_call.1} parent=1 // pred_region
      _
    $region33: #{tpu_custom_call.1} parent=1 // pred_fallthru
      _
    // Predicated region
    $region34: #{tpu_custom_call.1} parent=1 // pred_check
      _
    $region35: #{tpu_custom_call.1} parent=1 // pred_check_branch
      %53 = sbr.rel (0) target = $region37
    $region36: #{tpu_custom_call.1} parent=1 // pred_region
      %s55 = ssub.s32 128, 128
      %56 = vsyncadd [#allocation6], %s55
      %s58 = sshll.u32 [#allocation7], 4
      %s59 = int_to_ptr.vmem [resolvable:$true] %s58
      %61 = dma.hbm_to_vmem [thread:$0]  %s8, 128, %s59, [#allocation6]
    $region37: #{tpu_custom_call.1} parent=1 // pred_fallthru
      _
    // Predicated region
    $region38: #{tpu_custom_call.1} parent=1 // pred_check
      _
    $region39: #{tpu_custom_call.1} parent=1 // pred_check_branch
      %63 = sbr.rel (0) target = $region41
    $region40: #{tpu_custom_call.1} parent=1 // pred_region
      _
    $region41: #{tpu_custom_call.1} parent=1 // pred_fallthru
      _
    // Predicated region
    $region42: #{tpu_custom_call.1} parent=1 // pred_check
      _
    $region43: #{tpu_custom_call.1} parent=1 // pred_check_branch
      %65 = sbr.rel (0) target = $region45
    $region44: #{tpu_custom_call.1} parent=1 // pred_region
      %66 = dma.done [#allocation3], 1536
    $region45: #{tpu_custom_call.1} parent=1 // pred_fallthru
      _
    // Predicated region
    $region46: #{tpu_custom_call.1} parent=1 // pred_check
      _
    $region47: #{tpu_custom_call.1} parent=1 // pred_check_branch
      %68 = sbr.rel (0) target = $region49
    $region48: #{tpu_custom_call.1} parent=1 // pred_region
      %69 = dma.done [#allocation6], 16
    $region49: #{tpu_custom_call.1} parent=1 // pred_fallthru
      _
    // Predicated region
    $region50: #{tpu_custom_call.1} parent=1 // pred_check
      _
    $region51: #{tpu_custom_call.1} parent=1 // pred_check_branch
      %71 = sbr.rel (0) target = $region53
    $region52: #{tpu_custom_call.1} parent=1 // pred_region
      %72 = dma.done [#allocation6], 128
    $region53: #{tpu_custom_call.1} parent=1 // pred_fallthru
      _
    %v74 = vld [vmem:[%s0] sm:$0xff]
    %v75 = vld [vmem:[%s0 + $0x8] sm:$0xff]
    %v76 = vmul.f32 %v74, %v74
    %v77 = vmul.f32 %v75, %v75
    %vm78 = vcmask 523264
    %v79 = vsel %vm78, %v76, 0.0
    %80 = vadd.xlane.f32.xlu0 %v79
    %v81 = vpop.xlane.xlu0 %80
    %v82 = vsel %vm78, %v77, 0.0
    %83 = vadd.xlane.f32.xlu0 %v82
    %v84 = vpop.xlane.xlu0 %83
    %v85 = vrcp.pop 64.0
    %v86 = vmul.f32 %v81, %v85
    %v87 = vmul.f32 %v84, %v85
    %v88 = vadd.f32 %v86, 1e-06
    %v89 = vadd.f32 %v87, 1e-06
    %v90 = vrsqrt.pop %v88
    %v91 = vrsqrt.pop %v89
    %v92 = vmul.f32 %v74, %v90
    %v93 = vmul.f32 %v75, %v91
    %v94 = vld [vmem:[%s3] sm:$0x1]
    %v96 = vlaneseq
    %v97 = vshrl.u32 %v96, 7
    %v98 = vsub.s32 0, %v97
    %v99 = vrot.slane %v94, %v98
    %v101 = vmul.f32 %v92, %v99
    %v102 = vmul.f32 %v93, %v99
    %v103 = vpack.c.bf16 %v102, %v101
    %v104 = vld [vmem:[#allocation2] sm:$0xff]
    %v105 = vld [vmem:[#allocation2 + $0x8] sm:$0xf]
    %v106 = vld [vmem:[#allocation2 + $0xc] sm:$0xff]
    %v107 = vld [vmem:[#allocation2 + $0x14] sm:$0xf]
    %v108 = vld [vmem:[#allocation2 + $0x18] sm:$0xff]
    %v109 = vld [vmem:[#allocation2 + $0x20] sm:$0xf]
    %v110 = vld [vmem:[#allocation2 + $0x24] sm:$0xff]
    %v111 = vld [vmem:[#allocation2 + $0x2c] sm:$0xf]
    %v112 = vld [vmem:[#allocation2 + $0x30] sm:$0xff]
    %v113 = vld [vmem:[#allocation2 + $0x38] sm:$0xf]
    %v114 = vld [vmem:[#allocation2 + $0x3c] sm:$0xff]
    %v115 = vld [vmem:[#allocation2 + $0x44] sm:$0xf]
    %v116 = vld [vmem:[#allocation2 + $0x48] sm:$0xff]
    %v117 = vld [vmem:[#allocation2 + $0x50] sm:$0xf]
    %v118 = vld [vmem:[#allocation2 + $0x54] sm:$0xff]
    %v119 = vld [vmem:[#allocation2 + $0x5c] sm:$0xf]
    %v136 = vunpack.c.l.b16 %v104
    %v137 = vunpack.c.h.b16 %v104
    %v138 = vunpack.c.l.b16 %v105
    %v139 = vunpack.c.l.b16 %v106
    %v140 = vunpack.c.h.b16 %v106
    %v141 = vunpack.c.l.b16 %v107
    %v142 = vunpack.c.l.b16 %v108
    %v143 = vunpack.c.h.b16 %v108
    %v144 = vunpack.c.l.b16 %v109
    %v145 = vunpack.c.l.b16 %v110
    %v146 = vunpack.c.h.b16 %v110
    %v147 = vunpack.c.l.b16 %v111
    %v148 = vunpack.c.l.b16 %v112
    %v149 = vunpack.c.h.b16 %v112
    %v150 = vunpack.c.l.b16 %v113
    %v151 = vunpack.c.l.b16 %v114
    %v152 = vunpack.c.h.b16 %v114
    %v153 = vunpack.c.l.b16 %v115
    %v154 = vunpack.c.l.b16 %v116
    %v155 = vunpack.c.h.b16 %v116
    %v156 = vunpack.c.l.b16 %v117
    %v157 = vunpack.c.l.b16 %v118
    %v158 = vunpack.c.h.b16 %v118
    %v159 = vunpack.c.l.b16 %v119
    %v160 = vpack.c.b16 %v139, %v136
    %v161 = vpack.c.b16 %v140, %v137
    %v162 = vpack.c.b16 %v141, %v138
    %v163 = vpack.c.b16 %v145, %v142
    %v164 = vpack.c.b16 %v146, %v143
    %v165 = vpack.c.b16 %v147, %v144
    %v166 = vpack.c.b16 %v151, %v148
    %v167 = vpack.c.b16 %v152, %v149
    %v168 = vpack.c.b16 %v153, %v150
    %v169 = vpack.c.b16 %v157, %v154
    %v170 = vpack.c.b16 %v158, %v155
    %v171 = vpack.c.b16 %v159, %v156
    %v185 = vsel %vm78, %v103, 0
    %187 = vmatprep.subr.bf16.mxu0 0
    %188 = vmatpush1.bf16.msra.mxu0 0
    %189 = vmatprep.subr.bf16.mxu0 0
    %190 = vmatpush1.bf16.msra.mxu0 0
    %191 = vmatprep.subr.bf16.mxu0 0
    %192 = vmatpush1.bf16.msra.mxu0 0
    %193 = vmatprep.subr.bf16.mxu0 0
    %194 = vmatpush1.bf16.msra.mxu0 0
    %195 = vmatprep.subr.bf16.mxu0 %v170
    %196 = vmatpush1.bf16.msra.mxu0 %v169
    %197 = vmatprep.subr.bf16.mxu0 %v167
    %198 = vmatpush1.bf16.msra.mxu0 %v166
    %199 = vmatprep.subr.bf16.mxu0 %v164
    %200 = vmatpush1.bf16.msra.mxu0 %v163
    %201 = vmatprep.subr.bf16.mxu0 %v161
    %202 = vmatpush1.bf16.msra.mxu0 %v160
    %203 = vmatprep.subr.bf16.mxu0 0
    %204 = vmatpush2.bf16.msra.mxu0 0
    %205 = vmatprep.subr.bf16.mxu0 0
    %206 = vmatpush2.bf16.msra.mxu0 0
    %207 = vmatprep.subr.bf16.mxu0 0
    %208 = vmatpush2.bf16.msra.mxu0 0
    %209 = vmatprep.subr.bf16.mxu0 0
    %210 = vmatpush2.bf16.msra.mxu0 0
    %211 = vmatprep.subr.bf16.mxu0 0
    %212 = vmatpush2.bf16.msra.mxu0 0
    %213 = vmatprep.subr.bf16.mxu0 0
    %214 = vmatpush2.bf16.msra.mxu0 0
    %215 = vmatprep.subr.bf16.mxu0 0
    %216 = vmatpush2.bf16.msra.mxu0 0
    %217 = vmatprep.subr.bf16.mxu0 0
    %218 = vmatpush2.bf16.msra.mxu0 0
    %219 = vmatprep.mubr.bf16.mxu0 0
    %220 = vmatmul.mubr.bf16.gmra.mxu0 %v185
    %v221 = vpop.f32.mrf.mxu0
    %v222 = vadd.f32 0.0, %v221
    %v223 = vpop.f32.mrf.mxu0
    %v224 = vadd.f32 0.0, %v223
    %v225 = vpop.f32.mrf.mxu0
    %v226 = vadd.f32 0.0, %v225
    %v227 = vpop.f32.mrf.mxu0
    %v228 = vadd.f32 0.0, %v227
    %229 = vdwg.mxu0
    %230 = vmatprep.subr.bf16.mxu0 0
    %231 = vmatpush1.bf16.msra.mxu0 0
    %232 = vmatprep.subr.bf16.mxu0 0
    %233 = vmatpush1.bf16.msra.mxu0 0
    %234 = vmatprep.subr.bf16.mxu0 0
    %235 = vmatpush1.bf16.msra.mxu0 0
    %236 = vmatprep.subr.bf16.mxu0 0
    %237 = vmatpush1.bf16.msra.mxu0 0
    %238 = vmatprep.subr.bf16.mxu0 0
    %239 = vmatpush1.bf16.msra.mxu0 %v171
    %240 = vmatprep.subr.bf16.mxu0 0
    %241 = vmatpush1.bf16.msra.mxu0 %v168
    %242 = vmatprep.subr.bf16.mxu0 0
    %243 = vmatpush1.bf16.msra.mxu0 %v165
    %244 = vmatprep.subr.bf16.mxu0 0
    %245 = vmatpush1.bf16.msra.mxu0 %v162
    %246 = vmatprep.subr.bf16.mxu0 0
    %247 = vmatpush2.bf16.msra.mxu0 0
    %248 = vmatprep.subr.bf16.mxu0 0
    %249 = vmatpush2.bf16.msra.mxu0 0
    %250 = vmatprep.subr.bf16.mxu0 0
    %251 = vmatpush2.bf16.msra.mxu0 0
    %252 = vmatprep.subr.bf16.mxu0 0
    %253 = vmatpush2.bf16.msra.mxu0 0
    %254 = vmatprep.subr.bf16.mxu0 0
    %255 = vmatpush2.bf16.msra.mxu0 0
    %256 = vmatprep.subr.bf16.mxu0 0
    %257 = vmatpush2.bf16.msra.mxu0 0
    %258 = vmatprep.subr.bf16.mxu0 0
    %259 = vmatpush2.bf16.msra.mxu0 0
    %260 = vmatprep.subr.bf16.mxu0 0
    %261 = vmatpush2.bf16.msra.mxu0 0
    %262 = vmatprep.mubr.bf16.mxu0 0
    %263 = vmatmul.mubr.bf16.gmra.mxu0 %v185
    %v264 = vpop.f32.mrf.mxu0
    %v265 = vadd.f32 0.0, %v264
    %v266 = vpop.f32.mrf.mxu0
    %v267 = vpop.f32.mrf.mxu0
    %v268 = vadd.f32 0.0, %v267
    %v269 = vpop.f32.mrf.mxu0
    %270 = vdwg.mxu0
    %v271 = vld [vmem:[%s7] sm:$0xff]
    %v272 = vld [vmem:[#allocation7] sm:$0xff]
    %v273 = vmul.f32 %v222, %v271
    %v274 = vmul.f32 %v226, %v271
    %276 = vrot.lane.b32.xlu0 %v272, 64
    %v277 = vpop.permute.xlu0 %276
    %v279 = vmul.f32 %v224, %v277
    %v280 = vmul.f32 %v228, %v277
    %283 = vrot.lane.b32.xlu0 %v279, 64
    %v284 = vpop.permute.xlu0 %283
    %285 = vrot.lane.b32.xlu0 %v280, 64
    %v286 = vpop.permute.xlu0 %285
    %v289 = vadd.f32 %v273, %v284
    %v290 = vadd.f32 %v274, %v286
    %292 = vrot.lane.b32.xlu0 %v271, 64
    %v293 = vpop.permute.xlu0 %292
    %v295 = vmul.f32 %v222, %v293
    %v296 = vmul.f32 %v226, %v293
    %v297 = vmul.f32 %v265, %v272
    %v298 = vmul.f32 %v268, %v272
    %301 = vrot.lane.b32.xlu0 %v297, 64
    %v302 = vpop.permute.xlu0 %301
    %303 = vrot.lane.b32.xlu0 %v298, 64
    %v304 = vpop.permute.xlu0 %303
    %v307 = vadd.f32 %v295, %v302
    %v308 = vadd.f32 %v296, %v304
    %v309 = vld [vmem:[%s9] sm:$0xff]
    %v310 = vld [vmem:[%s9 + $0x8] sm:$0xff]
    %v311 = vpack.c.bf16 %v290, %v289
    %v312 = vpack.c.bf16 %v308, %v307
    %v313 = vpack.c.bf16 %v228, %v224
    %315 = vrot.lane.b32.xlu0 %v312, 64
    %v316 = vpop.permute.xlu0 %315
    %vm317 = vcmask 130048
    %v319 = vsel %vm317, %v311, 0
    %v322 = vsel %vm317, %v316, 0
    %324 = vmatprep.subr.bf16.mxu0 0
    %325 = vmatpush1.bf16.xpose.msra.mxu0 0
    %326 = vmatprep.subr.bf16.mxu0 0
    %327 = vmatpush1.bf16.xpose.msra.mxu0 0
    %328 = vmatprep.subr.bf16.mxu0 0
    %329 = vmatpush1.bf16.xpose.msra.mxu0 0
    %330 = vmatprep.subr.bf16.mxu0 0
    %331 = vmatpush1.bf16.xpose.msra.mxu0 0
    %332 = vmatprep.subr.bf16.mxu0 0
    %333 = vmatpush1.bf16.xpose.msra.mxu0 0
    %334 = vmatprep.subr.bf16.mxu0 0
    %335 = vmatpush1.bf16.xpose.msra.mxu0 0
    %336 = vmatprep.subr.bf16.mxu0 0
    %337 = vmatpush1.bf16.xpose.msra.mxu0 0
    %338 = vmatprep.subr.bf16.mxu0 0
    %339 = vmatpush1.bf16.xpose.msra.mxu0 %v322
    %340 = vmatprep.subr.bf16.mxu0 0
    %341 = vmatpush2.bf16.xpose.msra.mxu0 0
    %342 = vmatprep.subr.bf16.mxu0 0
    %343 = vmatpush2.bf16.xpose.msra.mxu0 0
    %344 = vmatprep.subr.bf16.mxu0 0
    %345 = vmatpush2.bf16.xpose.msra.mxu0 0
    %346 = vmatprep.subr.bf16.mxu0 0
    %347 = vmatpush2.bf16.xpose.msra.mxu0 0
    %348 = vmatprep.subr.bf16.mxu0 0
    %349 = vmatpush2.bf16.xpose.msra.mxu0 0
    %350 = vmatprep.subr.bf16.mxu0 0
    %351 = vmatpush2.bf16.xpose.msra.mxu0 0
    %352 = vmatprep.subr.bf16.mxu0 0
    %353 = vmatpush2.bf16.xpose.msra.mxu0 0
    %354 = vmatprep.subr.bf16.mxu0 0
    %355 = vmatpush2.bf16.xpose.msra.mxu0 0
    %356 = vmatprep.mubr.bf16.mxu0 0
    %357 = vmatmul.mubr.bf16.gmra.mxu0 %v319
    %v358 = vpop.f32.mrf.mxu0
    %v359 = vadd.f32 %v309, %v358
    %v360 = vpop.f32.mrf.mxu0
    %v361 = vpop.f32.mrf.mxu0
    %v362 = vadd.f32 %v310, %v361
    %v363 = vpop.f32.mrf.mxu0
    %364 = vdwg.mxu0
    %v365 = vsel %vm317, %v359, -inf
    %366 = vmax.xlane.f32.xlu0 %v365
    %v367 = vpop.xlane.xlu0 %366
    %v368 = vsel %vm317, %v362, -inf
    %369 = vmax.xlane.f32.xlu0 %v368
    %v370 = vpop.xlane.xlu0 %369
    %v371 = vsub.f32 %v359, %v367
    %v372 = vsub.f32 %v362, %v370
    %v373 = vmul.f32 %v371, 1.442695
    %v374 = vpow.pop %v373
    %v375 = vmul.f32 %v372, 1.442695
    %v376 = vpow.pop %v375
    %v377 = vsel %vm317, %v374, 0.0
    %378 = vadd.xlane.f32.xlu0 %v377
    %v379 = vpop.xlane.xlu0 %378
    %v380 = vsel %vm317, %v376, 0.0
    %381 = vadd.xlane.f32.xlu0 %v380
    %v382 = vpop.xlane.xlu0 %381
    %v383 = vrcp.pop %v379
    %v384 = vrcp.pop %v382
    %v385 = vmul.f32 %v374, %v383
    %v386 = vmul.f32 %v376, %v384
    %v387 = vpack.c.bf16 %v386, %v385
    %v389 = vsel %vm317, %v387, 0
    %391 = vmatprep.subr.bf16.mxu0 0
    %392 = vmatpush1.bf16.msra.mxu0 0
    %393 = vmatprep.subr.bf16.mxu0 0
    %394 = vmatpush1.bf16.msra.mxu0 0
    %395 = vmatprep.subr.bf16.mxu0 0
    %396 = vmatpush1.bf16.msra.mxu0 0
    %397 = vmatprep.subr.bf16.mxu0 0
    %398 = vmatpush1.bf16.msra.mxu0 0
    %399 = vmatprep.subr.bf16.mxu0 0
    %400 = vmatpush1.bf16.msra.mxu0 0
    %401 = vmatprep.subr.bf16.mxu0 0
    %402 = vmatpush1.bf16.msra.mxu0 0
    %403 = vmatprep.subr.bf16.mxu0 0
    %404 = vmatpush1.bf16.msra.mxu0 0
    %405 = vmatprep.subr.bf16.mxu0 0
    %406 = vmatpush1.bf16.msra.mxu0 %v313
    %407 = vmatprep.subr.bf16.mxu0 0
    %408 = vmatpush2.bf16.msra.mxu0 0
    %409 = vmatprep.subr.bf16.mxu0 0
    %410 = vmatpush2.bf16.msra.mxu0 0
    %411 = vmatprep.subr.bf16.mxu0 0
    %412 = vmatpush2.bf16.msra.mxu0 0
    %413 = vmatprep.subr.bf16.mxu0 0
    %414 = vmatpush2.bf16.msra.mxu0 0
    %415 = vmatprep.subr.bf16.mxu0 0
    %416 = vmatpush2.bf16.msra.mxu0 0
    %417 = vmatprep.subr.bf16.mxu0 0
    %418 = vmatpush2.bf16.msra.mxu0 0
    %419 = vmatprep.subr.bf16.mxu0 0
    %420 = vmatpush2.bf16.msra.mxu0 0
    %421 = vmatprep.subr.bf16.mxu0 0
    %422 = vmatpush2.bf16.msra.mxu0 0
    %423 = vmatprep.mubr.bf16.mxu0 0
    %424 = vmatmul.mubr.bf16.gmra.mxu0 %v389
    %v425 = vpop.f32.mrf.mxu0
    %v426 = vadd.f32 0.0, %v425
    %v427 = vpop.f32.mrf.mxu0
    %v428 = vpop.f32.mrf.mxu0
    %v429 = vadd.f32 0.0, %v428
    %v430 = vpop.f32.mrf.mxu0
    %431 = vdwg.mxu0
    %433 = vrot.lane.b32.xlu0 %v311, 112
    %v434 = vpop.permute.xlu0 %433
    %435 = vrot.lane.b32.xlu0 %v312, 48
    %v436 = vpop.permute.xlu0 %435
    %v438 = vsel %vm317, %v434, 0
    %v441 = vsel %vm317, %v436, 0
    %443 = vmatprep.subr.bf16.mxu0 0
    %444 = vmatpush1.bf16.xpose.msra.mxu0 0
    %445 = vmatprep.subr.bf16.mxu0 0
    %446 = vmatpush1.bf16.xpose.msra.mxu0 0
    %447 = vmatprep.subr.bf16.mxu0 0
    %448 = vmatpush1.bf16.xpose.msra.mxu0 0
    %449 = vmatprep.subr.bf16.mxu0 0
    %450 = vmatpush1.bf16.xpose.msra.mxu0 0
    %451 = vmatprep.subr.bf16.mxu0 0
    %452 = vmatpush1.bf16.xpose.msra.mxu0 0
    %453 = vmatprep.subr.bf16.mxu0 0
    %454 = vmatpush1.bf16.xpose.msra.mxu0 0
    %455 = vmatprep.subr.bf16.mxu0 0
    %456 = vmatpush1.bf16.xpose.msra.mxu0 0
    %457 = vmatprep.subr.bf16.mxu0 0
    %458 = vmatpush1.bf16.xpose.msra.mxu0 %v441
    %459 = vmatprep.subr.bf16.mxu0 0
    %460 = vmatpush2.bf16.xpose.msra.mxu0 0
    %461 = vmatprep.subr.bf16.mxu0 0
    %462 = vmatpush2.bf16.xpose.msra.mxu0 0
    %463 = vmatprep.subr.bf16.mxu0 0
    %464 = vmatpush2.bf16.xpose.msra.mxu0 0
    %465 = vmatprep.subr.bf16.mxu0 0
    %466 = vmatpush2.bf16.xpose.msra.mxu0 0
    %467 = vmatprep.subr.bf16.mxu0 0
    %468 = vmatpush2.bf16.xpose.msra.mxu0 0
    %469 = vmatprep.subr.bf16.mxu0 0
    %470 = vmatpush2.bf16.xpose.msra.mxu0 0
    %471 = vmatprep.subr.bf16.mxu0 0
    %472 = vmatpush2.bf16.xpose.msra.mxu0 0
    %473 = vmatprep.subr.bf16.mxu0 0
    %474 = vmatpush2.bf16.xpose.msra.mxu0 0
    %475 = vmatprep.mubr.bf16.mxu0 0
    %476 = vmatmul.mubr.bf16.gmra.mxu0 %v438
    %v477 = vpop.f32.mrf.mxu0
    %v478 = vadd.f32 %v309, %v477
    %v479 = vpop.f32.mrf.mxu0
    %v480 = vpop.f32.mrf.mxu0
    %v481 = vadd.f32 %v310, %v480
    %v482 = vpop.f32.mrf.mxu0
    %483 = vdwg.mxu0
    %v484 = vsel %vm317, %v478, -inf
    %485 = vmax.xlane.f32.xlu0 %v484
    %v486 = vpop.xlane.xlu0 %485
    %v487 = vsel %vm317, %v481, -inf
    %488 = vmax.xlane.f32.xlu0 %v487
    %v489 = vpop.xlane.xlu0 %488
    %v490 = vsub.f32 %v478, %v486
    %v491 = vsub.f32 %v481, %v489
    %v492 = vmul.f32 %v490, 1.442695
    %v493 = vpow.pop %v492
    %v494 = vmul.f32 %v491, 1.442695
    %v495 = vpow.pop %v494
    %v496 = vsel %vm317, %v493, 0.0
    %497 = vadd.xlane.f32.xlu0 %v496
    %v498 = vpop.xlane.xlu0 %497
    %v499 = vsel %vm317, %v495, 0.0
    %500 = vadd.xlane.f32.xlu0 %v499
    %v501 = vpop.xlane.xlu0 %500
    %v502 = vrcp.pop %v498
    %v503 = vrcp.pop %v501
    %v504 = vmul.f32 %v493, %v502
    %v505 = vmul.f32 %v495, %v503
    %v506 = vpack.c.bf16 %v505, %v504
    %508 = vrot.lane.b32.xlu0 %v313, 112
    %v509 = vpop.permute.xlu0 %508
    %v512 = vsel %vm317, %v506, 0
    %514 = vmatprep.subr.bf16.mxu0 0
    %515 = vmatpush1.bf16.msra.mxu0 0
    %516 = vmatprep.subr.bf16.mxu0 0
    %517 = vmatpush1.bf16.msra.mxu0 0
    %518 = vmatprep.subr.bf16.mxu0 0
    %519 = vmatpush1.bf16.msra.mxu0 0
    %520 = vmatprep.subr.bf16.mxu0 0
    %521 = vmatpush1.bf16.msra.mxu0 0
    %522 = vmatprep.subr.bf16.mxu0 0
    %523 = vmatpush1.bf16.msra.mxu0 0
    %524 = vmatprep.subr.bf16.mxu0 0
    %525 = vmatpush1.bf16.msra.mxu0 0
    %526 = vmatprep.subr.bf16.mxu0 0
    %527 = vmatpush1.bf16.msra.mxu0 0
    %528 = vmatprep.subr.bf16.mxu0 0
    %529 = vmatpush1.bf16.msra.mxu0 %v509
    %530 = vmatprep.subr.bf16.mxu0 0
    %531 = vmatpush2.bf16.msra.mxu0 0
    %532 = vmatprep.subr.bf16.mxu0 0
    %533 = vmatpush2.bf16.msra.mxu0 0
    %534 = vmatprep.subr.bf16.mxu0 0
    %535 = vmatpush2.bf16.msra.mxu0 0
    %536 = vmatprep.subr.bf16.mxu0 0
    %537 = vmatpush2.bf16.msra.mxu0 0
    %538 = vmatprep.subr.bf16.mxu0 0
    %539 = vmatpush2.bf16.msra.mxu0 0
    %540 = vmatprep.subr.bf16.mxu0 0
    %541 = vmatpush2.bf16.msra.mxu0 0
    %542 = vmatprep.subr.bf16.mxu0 0
    %543 = vmatpush2.bf16.msra.mxu0 0
    %544 = vmatprep.subr.bf16.mxu0 0
    %545 = vmatpush2.bf16.msra.mxu0 0
    %546 = vmatprep.mubr.bf16.mxu0 0
    %547 = vmatmul.mubr.bf16.gmra.mxu0 %v512
    %v548 = vpop.f32.mrf.mxu0
    %v549 = vadd.f32 0.0, %v548
    %v550 = vpop.f32.mrf.mxu0
    %v551 = vpop.f32.mrf.mxu0
    %v552 = vadd.f32 0.0, %v551
    %v553 = vpop.f32.mrf.mxu0
    %554 = vdwg.mxu0
    %555 = vrot.lane.b32.xlu0 %v311, 96
    %v556 = vpop.permute.xlu0 %555
    %557 = vrot.lane.b32.xlu0 %v312, 32
    %v558 = vpop.permute.xlu0 %557
    %v560 = vsel %vm317, %v556, 0
    %v563 = vsel %vm317, %v558, 0
    %565 = vmatprep.subr.bf16.mxu0 0
    %566 = vmatpush1.bf16.xpose.msra.mxu0 0
    %567 = vmatprep.subr.bf16.mxu0 0
    %568 = vmatpush1.bf16.xpose.msra.mxu0 0
    %569 = vmatprep.subr.bf16.mxu0 0
    %570 = vmatpush1.bf16.xpose.msra.mxu0 0
    %571 = vmatprep.subr.bf16.mxu0 0
    %572 = vmatpush1.bf16.xpose.msra.mxu0 0
    %573 = vmatprep.subr.bf16.mxu0 0
    %574 = vmatpush1.bf16.xpose.msra.mxu0 0
    %575 = vmatprep.subr.bf16.mxu0 0
    %576 = vmatpush1.bf16.xpose.msra.mxu0 0
    %577 = vmatprep.subr.bf16.mxu0 0
    %578 = vmatpush1.bf16.xpose.msra.mxu0 0
    %579 = vmatprep.subr.bf16.mxu0 0
    %580 = vmatpush1.bf16.xpose.msra.mxu0 %v563
    %581 = vmatprep.subr.bf16.mxu0 0
    %582 = vmatpush2.bf16.xpose.msra.mxu0 0
    %583 = vmatprep.subr.bf16.mxu0 0
    %584 = vmatpush2.bf16.xpose.msra.mxu0 0
    %585 = vmatprep.subr.bf16.mxu0 0
    %586 = vmatpush2.bf16.xpose.msra.mxu0 0
    %587 = vmatprep.subr.bf16.mxu0 0
    %588 = vmatpush2.bf16.xpose.msra.mxu0 0
    %589 = vmatprep.subr.bf16.mxu0 0
    %590 = vmatpush2.bf16.xpose.msra.mxu0 0
    %591 = vmatprep.subr.bf16.mxu0 0
    %592 = vmatpush2.bf16.xpose.msra.mxu0 0
    %593 = vmatprep.subr.bf16.mxu0 0
    %594 = vmatpush2.bf16.xpose.msra.mxu0 0
    %595 = vmatprep.subr.bf16.mxu0 0
    %596 = vmatpush2.bf16.xpose.msra.mxu0 0
    %597 = vmatprep.mubr.bf16.mxu0 0
    %598 = vmatmul.mubr.bf16.gmra.mxu0 %v560
    %v599 = vpop.f32.mrf.mxu0
    %v600 = vadd.f32 %v309, %v599
    %v601 = vpop.f32.mrf.mxu0
    %v602 = vpop.f32.mrf.mxu0
    %v603 = vadd.f32 %v310, %v602
    %v604 = vpop.f32.mrf.mxu0
    %605 = vdwg.mxu0
    %v606 = vsel %vm317, %v600, -inf
    %607 = vmax.xlane.f32.xlu0 %v606
    %v608 = vpop.xlane.xlu0 %607
    %v609 = vsel %vm317, %v603, -inf
    %610 = vmax.xlane.f32.xlu0 %v609
    %v611 = vpop.xlane.xlu0 %610
    %v612 = vsub.f32 %v600, %v608
    %v613 = vsub.f32 %v603, %v611
    %v614 = vmul.f32 %v612, 1.442695
    %v615 = vpow.pop %v614
    %v616 = vmul.f32 %v613, 1.442695
    %v617 = vpow.pop %v616
    %v618 = vsel %vm317, %v615, 0.0
    %619 = vadd.xlane.f32.xlu0 %v618
    %v620 = vpop.xlane.xlu0 %619
    %v621 = vsel %vm317, %v617, 0.0
    %622 = vadd.xlane.f32.xlu0 %v621
    %v623 = vpop.xlane.xlu0 %622
    %v624 = vrcp.pop %v620
    %v625 = vrcp.pop %v623
    %v626 = vmul.f32 %v615, %v624
    %v627 = vmul.f32 %v617, %v625
    %v628 = vpack.c.bf16 %v627, %v626
    %629 = vrot.lane.b32.xlu0 %v313, 96
    %v630 = vpop.permute.xlu0 %629
    %v633 = vsel %vm317, %v628, 0
    %635 = vmatprep.subr.bf16.mxu0 0
    %636 = vmatpush1.bf16.msra.mxu0 0
    %637 = vmatprep.subr.bf16.mxu0 0
    %638 = vmatpush1.bf16.msra.mxu0 0
    %639 = vmatprep.subr.bf16.mxu0 0
    %640 = vmatpush1.bf16.msra.mxu0 0
    %641 = vmatprep.subr.bf16.mxu0 0
    %642 = vmatpush1.bf16.msra.mxu0 0
    %643 = vmatprep.subr.bf16.mxu0 0
    %644 = vmatpush1.bf16.msra.mxu0 0
    %645 = vmatprep.subr.bf16.mxu0 0
    %646 = vmatpush1.bf16.msra.mxu0 0
    %647 = vmatprep.subr.bf16.mxu0 0
    %648 = vmatpush1.bf16.msra.mxu0 0
    %649 = vmatprep.subr.bf16.mxu0 0
    %650 = vmatpush1.bf16.msra.mxu0 %v630
    %651 = vmatprep.subr.bf16.mxu0 0
    %652 = vmatpush2.bf16.msra.mxu0 0
    %653 = vmatprep.subr.bf16.mxu0 0
    %654 = vmatpush2.bf16.msra.mxu0 0
    %655 = vmatprep.subr.bf16.mxu0 0
    %656 = vmatpush2.bf16.msra.mxu0 0
    %657 = vmatprep.subr.bf16.mxu0 0
    %658 = vmatpush2.bf16.msra.mxu0 0
    %659 = vmatprep.subr.bf16.mxu0 0
    %660 = vmatpush2.bf16.msra.mxu0 0
    %661 = vmatprep.subr.bf16.mxu0 0
    %662 = vmatpush2.bf16.msra.mxu0 0
    %663 = vmatprep.subr.bf16.mxu0 0
    %664 = vmatpush2.bf16.msra.mxu0 0
    %665 = vmatprep.subr.bf16.mxu0 0
    %666 = vmatpush2.bf16.msra.mxu0 0
    %667 = vmatprep.mubr.bf16.mxu0 0
    %668 = vmatmul.mubr.bf16.gmra.mxu0 %v633
    %v669 = vpop.f32.mrf.mxu0
    %v670 = vadd.f32 0.0, %v669
    %v671 = vpop.f32.mrf.mxu0
    %v672 = vpop.f32.mrf.mxu0
    %v673 = vadd.f32 0.0, %v672
    %v674 = vpop.f32.mrf.mxu0
    %675 = vdwg.mxu0
    %676 = vrot.lane.b32.xlu0 %v311, 80
    %v677 = vpop.permute.xlu0 %676
    %678 = vrot.lane.b32.xlu0 %v312, 16
    %v679 = vpop.permute.xlu0 %678
    %v681 = vsel %vm317, %v677, 0
    %v684 = vsel %vm317, %v679, 0
    %686 = vmatprep.subr.bf16.mxu0 0
    %687 = vmatpush1.bf16.xpose.msra.mxu0 0
    %688 = vmatprep.subr.bf16.mxu0 0
    %689 = vmatpush1.bf16.xpose.msra.mxu0 0
    %690 = vmatprep.subr.bf16.mxu0 0
    %691 = vmatpush1.bf16.xpose.msra.mxu0 0
    %692 = vmatprep.subr.bf16.mxu0 0
    %693 = vmatpush1.bf16.xpose.msra.mxu0 0
    %694 = vmatprep.subr.bf16.mxu0 0
    %695 = vmatpush1.bf16.xpose.msra.mxu0 0
    %696 = vmatprep.subr.bf16.mxu0 0
    %697 = vmatpush1.bf16.xpose.msra.mxu0 0
    %698 = vmatprep.subr.bf16.mxu0 0
    %699 = vmatpush1.bf16.xpose.msra.mxu0 0
    %700 = vmatprep.subr.bf16.mxu0 0
    %701 = vmatpush1.bf16.xpose.msra.mxu0 %v684
    %702 = vmatprep.subr.bf16.mxu0 0
    %703 = vmatpush2.bf16.xpose.msra.mxu0 0
    %704 = vmatprep.subr.bf16.mxu0 0
    %705 = vmatpush2.bf16.xpose.msra.mxu0 0
    %706 = vmatprep.subr.bf16.mxu0 0
    %707 = vmatpush2.bf16.xpose.msra.mxu0 0
    %708 = vmatprep.subr.bf16.mxu0 0
    %709 = vmatpush2.bf16.xpose.msra.mxu0 0
    %710 = vmatprep.subr.bf16.mxu0 0
    %711 = vmatpush2.bf16.xpose.msra.mxu0 0
    %712 = vmatprep.subr.bf16.mxu0 0
    %713 = vmatpush2.bf16.xpose.msra.mxu0 0
    %714 = vmatprep.subr.bf16.mxu0 0
    %715 = vmatpush2.bf16.xpose.msra.mxu0 0
    %716 = vmatprep.subr.bf16.mxu0 0
    %717 = vmatpush2.bf16.xpose.msra.mxu0 0
    %718 = vmatprep.mubr.bf16.mxu0 0
    %719 = vmatmul.mubr.bf16.gmra.mxu0 %v681
    %v720 = vpop.f32.mrf.mxu0
    %v721 = vadd.f32 %v309, %v720
    %v722 = vpop.f32.mrf.mxu0
    %v723 = vpop.f32.mrf.mxu0
    %v724 = vadd.f32 %v310, %v723
    %v725 = vpop.f32.mrf.mxu0
    %726 = vdwg.mxu0
    %v727 = vsel %vm317, %v721, -inf
    %728 = vmax.xlane.f32.xlu0 %v727
    %v729 = vpop.xlane.xlu0 %728
    %v730 = vsel %vm317, %v724, -inf
    %731 = vmax.xlane.f32.xlu0 %v730
    %v732 = vpop.xlane.xlu0 %731
    %v733 = vsub.f32 %v721, %v729
    %v734 = vsub.f32 %v724, %v732
    %v735 = vmul.f32 %v733, 1.442695
    %v736 = vpow.pop %v735
    %v737 = vmul.f32 %v734, 1.442695
    %v738 = vpow.pop %v737
    %v739 = vsel %vm317, %v736, 0.0
    %740 = vadd.xlane.f32.xlu0 %v739
    %v741 = vpop.xlane.xlu0 %740
    %v742 = vsel %vm317, %v738, 0.0
    %743 = vadd.xlane.f32.xlu0 %v742
    %v744 = vpop.xlane.xlu0 %743
    %v745 = vrcp.pop %v741
    %v746 = vrcp.pop %v744
    %v747 = vmul.f32 %v736, %v745
    %v748 = vmul.f32 %v738, %v746
    %v749 = vpack.c.bf16 %v748, %v747
    %750 = vrot.lane.b32.xlu0 %v313, 80
    %v751 = vpop.permute.xlu0 %750
    %v754 = vsel %vm317, %v749, 0
    %756 = vmatprep.subr.bf16.mxu0 0
    %757 = vmatpush1.bf16.msra.mxu0 0
    %758 = vmatprep.subr.bf16.mxu0 0
    %759 = vmatpush1.bf16.msra.mxu0 0
    %760 = vmatprep.subr.bf16.mxu0 0
    %761 = vmatpush1.bf16.msra.mxu0 0
    %762 = vmatprep.subr.bf16.mxu0 0
    %763 = vmatpush1.bf16.msra.mxu0 0
    %764 = vmatprep.subr.bf16.mxu0 0
    %765 = vmatpush1.bf16.msra.mxu0 0
    %766 = vmatprep.subr.bf16.mxu0 0
    %767 = vmatpush1.bf16.msra.mxu0 0
    %768 = vmatprep.subr.bf16.mxu0 0
    %769 = vmatpush1.bf16.msra.mxu0 0
    %770 = vmatprep.subr.bf16.mxu0 0
    %771 = vmatpush1.bf16.msra.mxu0 %v751
    %772 = vmatprep.subr.bf16.mxu0 0
    %773 = vmatpush2.bf16.msra.mxu0 0
    %774 = vmatprep.subr.bf16.mxu0 0
    %775 = vmatpush2.bf16.msra.mxu0 0
    %776 = vmatprep.subr.bf16.mxu0 0
    %777 = vmatpush2.bf16.msra.mxu0 0
    %778 = vmatprep.subr.bf16.mxu0 0
    %779 = vmatpush2.bf16.msra.mxu0 0
    %780 = vmatprep.subr.bf16.mxu0 0
    %781 = vmatpush2.bf16.msra.mxu0 0
    %782 = vmatprep.subr.bf16.mxu0 0
    %783 = vmatpush2.bf16.msra.mxu0 0
    %784 = vmatprep.subr.bf16.mxu0 0
    %785 = vmatpush2.bf16.msra.mxu0 0
    %786 = vmatprep.subr.bf16.mxu0 0
    %787 = vmatpush2.bf16.msra.mxu0 0
    %788 = vmatprep.mubr.bf16.mxu0 0
    %789 = vmatmul.mubr.bf16.gmra.mxu0 %v754
    %v790 = vpop.f32.mrf.mxu0
    %v791 = vadd.f32 0.0, %v790
    %v792 = vpop.f32.mrf.mxu0
    %v793 = vpop.f32.mrf.mxu0
    %v794 = vadd.f32 0.0, %v793
    %v795 = vpop.f32.mrf.mxu0
    %796 = vdwg.mxu0
    %799 = vrot.lane.b32.xlu0 %v549, 16
    %v800 = vpop.permute.xlu0 %799
    %801 = vrot.lane.b32.xlu0 %v552, 16
    %v802 = vpop.permute.xlu0 %801
    %807 = vrot.lane.b32.xlu0 %v670, 32
    %v808 = vpop.permute.xlu0 %807
    %809 = vrot.lane.b32.xlu0 %v673, 32
    %v810 = vpop.permute.xlu0 %809
    %815 = vrot.lane.b32.xlu0 %v791, 48
    %v816 = vpop.permute.xlu0 %815
    %817 = vrot.lane.b32.xlu0 %v794, 48
    %v818 = vpop.permute.xlu0 %817
    %v821 = vsel %vm317, %v426, %v800
    %v822 = vsel %vm317, %v429, %v802
    %vm823 = vcmask 261120
    %v824 = vsel %vm823, %v821, %v808
    %v825 = vsel %vm823, %v822, %v810
    %vm826 = vcmask 392192
    %v827 = vsel %vm826, %v824, %v816
    %v828 = vsel %vm826, %v825, %v818
    %v829 = vpack.c.bf16 %v828, %v827
    %v830 = vld [vmem:[%s2] sm:$0xf]
    %v831 = vld [vmem:[%s2 + $0x4] sm:$0xf]
    %v832 = vld [vmem:[%s2 + $0x8] sm:$0xf]
    %v833 = vld [vmem:[%s2 + $0xc] sm:$0xf]
    %v834 = vld [vmem:[%s2 + $0x10] sm:$0xf]
    %v835 = vld [vmem:[%s2 + $0x14] sm:$0xf]
    %v836 = vld [vmem:[%s2 + $0x18] sm:$0xf]
    %v837 = vld [vmem:[%s2 + $0x1c] sm:$0xf]
    %v846 = vunpack.c.l.b16 %v830
    %v847 = vunpack.c.l.b16 %v831
    %v848 = vunpack.c.l.b16 %v832
    %v849 = vunpack.c.l.b16 %v833
    %v850 = vunpack.c.l.b16 %v834
    %v851 = vunpack.c.l.b16 %v835
    %v852 = vunpack.c.l.b16 %v836
    %v853 = vunpack.c.l.b16 %v837
    %v854 = vpack.c.b16 %v847, %v846
    %v855 = vpack.c.b16 %v849, %v848
    %v856 = vpack.c.b16 %v851, %v850
    %v857 = vpack.c.b16 %v853, %v852
    %v863 = vsel %vm78, %v829, 0
    %865 = vmatprep.subr.bf16.mxu0 0
    %866 = vmatpush1.bf16.msra.mxu0 0
    %867 = vmatprep.subr.bf16.mxu0 0
    %868 = vmatpush1.bf16.msra.mxu0 0
    %869 = vmatprep.subr.bf16.mxu0 0
    %870 = vmatpush1.bf16.msra.mxu0 0
    %871 = vmatprep.subr.bf16.mxu0 0
    %872 = vmatpush1.bf16.msra.mxu0 0
    %873 = vmatprep.subr.bf16.mxu0 0
    %874 = vmatpush1.bf16.msra.mxu0 %v857
    %875 = vmatprep.subr.bf16.mxu0 0
    %876 = vmatpush1.bf16.msra.mxu0 %v856
    %877 = vmatprep.subr.bf16.mxu0 0
    %878 = vmatpush1.bf16.msra.mxu0 %v855
    %879 = vmatprep.subr.bf16.mxu0 0
    %880 = vmatpush1.bf16.msra.mxu0 %v854
    %881 = vmatprep.subr.bf16.mxu0 0
    %882 = vmatpush2.bf16.msra.mxu0 0
    %883 = vmatprep.subr.bf16.mxu0 0
    %884 = vmatpush2.bf16.msra.mxu0 0
    %885 = vmatprep.subr.bf16.mxu0 0
    %886 = vmatpush2.bf16.msra.mxu0 0
    %887 = vmatprep.subr.bf16.mxu0 0
    %888 = vmatpush2.bf16.msra.mxu0 0
    %889 = vmatprep.subr.bf16.mxu0 0
    %890 = vmatpush2.bf16.msra.mxu0 0
    %891 = vmatprep.subr.bf16.mxu0 0
    %892 = vmatpush2.bf16.msra.mxu0 0
    %893 = vmatprep.subr.bf16.mxu0 0
    %894 = vmatpush2.bf16.msra.mxu0 0
    %895 = vmatprep.subr.bf16.mxu0 0
    %896 = vmatpush2.bf16.msra.mxu0 0
    %897 = vmatprep.mubr.bf16.mxu0 0
    %898 = vmatmul.mubr.bf16.gmra.mxu0 %v863
    %v899 = vpop.f32.mrf.mxu0
    %v900 = vadd.f32 0.0, %v899
    %v901 = vpop.f32.mrf.mxu0
    %v902 = vpop.f32.mrf.mxu0
    %v903 = vadd.f32 0.0, %v902
    %v904 = vpop.f32.mrf.mxu0
    %905 = vdwg.mxu0
    %v906 = vadd.f32 %v101, %v900
    %v907 = vadd.f32 %v102, %v903
    %v908 = vmul.f32 %v906, %v906
    %v909 = vmul.f32 %v907, %v907
    %v910 = vsel %vm78, %v908, 0.0
    %911 = vadd.xlane.f32.xlu0 %v910
    %v912 = vpop.xlane.xlu0 %911
    %v913 = vsel %vm78, %v909, 0.0
    %914 = vadd.xlane.f32.xlu0 %v913
    %v915 = vpop.xlane.xlu0 %914
    %v916 = vmul.f32 %v912, %v85
    %v917 = vmul.f32 %v915, %v85
    %v918 = vadd.f32 %v916, 1e-06
    %v919 = vadd.f32 %v917, 1e-06
    %v920 = vrsqrt.pop %v918
    %v921 = vrsqrt.pop %v919
    %v922 = vmul.f32 %v906, %v920
    %v923 = vmul.f32 %v907, %v921
    %v924 = vld [vmem:[#allocation5] sm:$0x1]
    %v926 = vlaneseq
    %v927 = vshrl.u32 %v926, 7
    %v928 = vsub.s32 0, %v927
    %v929 = vrot.slane %v924, %v928
    %v931 = vmul.f32 %v922, %v929
    %v932 = vmul.f32 %v923, %v929
    %v933 = vpack.c.bf16 %v932, %v931
    %v934 = vld [vmem:[%s5] sm:$0xff]
    %v935 = vld [vmem:[%s5 + $0x8] sm:$0xff]
    %v936 = vld [vmem:[%s5 + $0x10] sm:$0xff]
    %v937 = vld [vmem:[%s5 + $0x18] sm:$0xff]
    %v938 = vld [vmem:[%s5 + $0x20] sm:$0xff]
    %v939 = vld [vmem:[%s5 + $0x28] sm:$0xff]
    %v940 = vld [vmem:[%s5 + $0x30] sm:$0xff]
    %v941 = vld [vmem:[%s5 + $0x38] sm:$0xff]
    %v942 = vld [vmem:[%s5 + $0x40] sm:$0xff]
    %v943 = vld [vmem:[%s5 + $0x48] sm:$0xff]
    %v944 = vld [vmem:[%s5 + $0x50] sm:$0xff]
    %v945 = vld [vmem:[%s5 + $0x58] sm:$0xff]
    %v946 = vld [vmem:[%s5 + $0x60] sm:$0xff]
    %v947 = vld [vmem:[%s5 + $0x68] sm:$0xff]
    %v948 = vld [vmem:[%s5 + $0x70] sm:$0xff]
    %v949 = vld [vmem:[%s5 + $0x78] sm:$0xff]
    %v966 = vunpack.c.l.b16 %v934
    %v967 = vunpack.c.h.b16 %v934
    %v968 = vunpack.c.l.b16 %v935
    %v969 = vunpack.c.h.b16 %v935
    %v970 = vunpack.c.l.b16 %v936
    %v971 = vunpack.c.h.b16 %v936
    %v972 = vunpack.c.l.b16 %v937
    %v973 = vunpack.c.h.b16 %v937
    %v974 = vunpack.c.l.b16 %v938
    %v975 = vunpack.c.h.b16 %v938
    %v976 = vunpack.c.l.b16 %v939
    %v977 = vunpack.c.h.b16 %v939
    %v978 = vunpack.c.l.b16 %v940
    %v979 = vunpack.c.h.b16 %v940
    %v980 = vunpack.c.l.b16 %v941
    %v981 = vunpack.c.h.b16 %v941
    %v982 = vunpack.c.l.b16 %v942
    %v983 = vunpack.c.h.b16 %v942
    %v984 = vunpack.c.l.b16 %v943
    %v985 = vunpack.c.h.b16 %v943
    %v986 = vunpack.c.l.b16 %v944
    %v987 = vunpack.c.h.b16 %v944
    %v988 = vunpack.c.l.b16 %v945
    %v989 = vunpack.c.h.b16 %v945
    %v990 = vunpack.c.l.b16 %v946
    %v991 = vunpack.c.h.b16 %v946
    %v992 = vunpack.c.l.b16 %v947
    %v993 = vunpack.c.h.b16 %v947
    %v994 = vunpack.c.l.b16 %v948
    %v995 = vunpack.c.h.b16 %v948
    %v996 = vunpack.c.l.b16 %v949
    %v997 = vunpack.c.h.b16 %v949
    %v998 = vpack.c.b16 %v970, %v966
    %v999 = vpack.c.b16 %v971, %v967
    %v1000 = vpack.c.b16 %v972, %v968
    %v1001 = vpack.c.b16 %v973, %v969
    %v1002 = vpack.c.b16 %v978, %v974
    %v1003 = vpack.c.b16 %v979, %v975
    %v1004 = vpack.c.b16 %v980, %v976
    %v1005 = vpack.c.b16 %v981, %v977
    %v1006 = vpack.c.b16 %v986, %v982
    %v1007 = vpack.c.b16 %v987, %v983
    %v1008 = vpack.c.b16 %v988, %v984
    %v1009 = vpack.c.b16 %v989, %v985
    %v1010 = vpack.c.b16 %v994, %v990
    %v1011 = vpack.c.b16 %v995, %v991
    %v1012 = vpack.c.b16 %v996, %v992
    %v1013 = vpack.c.b16 %v997, %v993
    %v1031 = vsel %vm78, %v933, 0
    %1033 = vmatprep.subr.bf16.mxu0 0
    %1034 = vmatpush1.bf16.msra.mxu0 0
    %1035 = vmatprep.subr.bf16.mxu0 0
    %1036 = vmatpush1.bf16.msra.mxu0 0
    %1037 = vmatprep.subr.bf16.mxu0 0
    %1038 = vmatpush1.bf16.msra.mxu0 0
    %1039 = vmatprep.subr.bf16.mxu0 0
    %1040 = vmatpush1.bf16.msra.mxu0 0
    %1041 = vmatprep.subr.bf16.mxu0 %v1011
    %1042 = vmatpush1.bf16.msra.mxu0 %v1010
    %1043 = vmatprep.subr.bf16.mxu0 %v1007
    %1044 = vmatpush1.bf16.msra.mxu0 %v1006
    %1045 = vmatprep.subr.bf16.mxu0 %v1003
    %1046 = vmatpush1.bf16.msra.mxu0 %v1002
    %1047 = vmatprep.subr.bf16.mxu0 %v999
    %1048 = vmatpush1.bf16.msra.mxu0 %v998
    %1049 = vmatprep.subr.bf16.mxu0 0
    %1050 = vmatpush2.bf16.msra.mxu0 0
    %1051 = vmatprep.subr.bf16.mxu0 0
    %1052 = vmatpush2.bf16.msra.mxu0 0
    %1053 = vmatprep.subr.bf16.mxu0 0
    %1054 = vmatpush2.bf16.msra.mxu0 0
    %1055 = vmatprep.subr.bf16.mxu0 0
    %1056 = vmatpush2.bf16.msra.mxu0 0
    %1057 = vmatprep.subr.bf16.mxu0 0
    %1058 = vmatpush2.bf16.msra.mxu0 0
    %1059 = vmatprep.subr.bf16.mxu0 0
    %1060 = vmatpush2.bf16.msra.mxu0 0
    %1061 = vmatprep.subr.bf16.mxu0 0
    %1062 = vmatpush2.bf16.msra.mxu0 0
    %1063 = vmatprep.subr.bf16.mxu0 0
    %1064 = vmatpush2.bf16.msra.mxu0 0
    %1065 = vmatprep.mubr.bf16.mxu0 0
    %1066 = vmatmul.mubr.bf16.gmra.mxu0 %v1031
    %v1067 = vpop.f32.mrf.mxu0
    %v1068 = vadd.f32 0.0, %v1067
    %v1069 = vpop.f32.mrf.mxu0
    %v1070 = vadd.f32 0.0, %v1069
    %v1071 = vpop.f32.mrf.mxu0
    %v1072 = vadd.f32 0.0, %v1071
    %v1073 = vpop.f32.mrf.mxu0
    %v1074 = vadd.f32 0.0, %v1073
    %1075 = vdwg.mxu0
    %1076 = vmatprep.subr.bf16.mxu0 0
    %1077 = vmatpush1.bf16.msra.mxu0 0
    %1078 = vmatprep.subr.bf16.mxu0 0
    %1079 = vmatpush1.bf16.msra.mxu0 0
    %1080 = vmatprep.subr.bf16.mxu0 0
    %1081 = vmatpush1.bf16.msra.mxu0 0
    %1082 = vmatprep.subr.bf16.mxu0 0
    %1083 = vmatpush1.bf16.msra.mxu0 0
    %1084 = vmatprep.subr.bf16.mxu0 %v1013
    %1085 = vmatpush1.bf16.msra.mxu0 %v1012
    %1086 = vmatprep.subr.bf16.mxu0 %v1009
    %1087 = vmatpush1.bf16.msra.mxu0 %v1008
    %1088 = vmatprep.subr.bf16.mxu0 %v1005
    %1089 = vmatpush1.bf16.msra.mxu0 %v1004
    %1090 = vmatprep.subr.bf16.mxu0 %v1001
    %1091 = vmatpush1.bf16.msra.mxu0 %v1000
    %1092 = vmatprep.subr.bf16.mxu0 0
    %1093 = vmatpush2.bf16.msra.mxu0 0
    %1094 = vmatprep.subr.bf16.mxu0 0
    %1095 = vmatpush2.bf16.msra.mxu0 0
    %1096 = vmatprep.subr.bf16.mxu0 0
    %1097 = vmatpush2.bf16.msra.mxu0 0
    %1098 = vmatprep.subr.bf16.mxu0 0
    %1099 = vmatpush2.bf16.msra.mxu0 0
    %1100 = vmatprep.subr.bf16.mxu0 0
    %1101 = vmatpush2.bf16.msra.mxu0 0
    %1102 = vmatprep.subr.bf16.mxu0 0
    %1103 = vmatpush2.bf16.msra.mxu0 0
    %1104 = vmatprep.subr.bf16.mxu0 0
    %1105 = vmatpush2.bf16.msra.mxu0 0
    %1106 = vmatprep.subr.bf16.mxu0 0
    %1107 = vmatpush2.bf16.msra.mxu0 0
    %1108 = vmatprep.mubr.bf16.mxu0 0
    %1109 = vmatmul.mubr.bf16.gmra.mxu0 %v1031
    %v1110 = vpop.f32.mrf.mxu0
    %v1111 = vadd.f32 0.0, %v1110
    %v1112 = vpop.f32.mrf.mxu0
    %v1113 = vadd.f32 0.0, %v1112
    %v1114 = vpop.f32.mrf.mxu0
    %v1115 = vadd.f32 0.0, %v1114
    %v1116 = vpop.f32.mrf.mxu0
    %v1117 = vadd.f32 0.0, %v1116
    %1118 = vdwg.mxu0
    %v1119 = vxor.u32 %v1068, 2147483648
    %v1120 = vxor.u32 %v1070, 2147483648
    %v1121 = vxor.u32 %v1072, 2147483648
    %v1122 = vxor.u32 %v1074, 2147483648
    %v1123 = vmul.f32 %v1119, 1.442695
    %v1124 = vpow.pop %v1123
    %v1125 = vmul.f32 %v1120, 1.442695
    %v1126 = vpow.pop %v1125
    %v1127 = vmul.f32 %v1121, 1.442695
    %v1128 = vpow.pop %v1127
    %v1129 = vmul.f32 %v1122, 1.442695
    %v1130 = vpow.pop %v1129
    %v1131 = vadd.f32 %v1124, 1.0
    %v1132 = vadd.f32 %v1126, 1.0
    %v1133 = vadd.f32 %v1128, 1.0
    %v1134 = vadd.f32 %v1130, 1.0
    %v1135 = vrcp.pop %v1131
    %v1136 = vmul.f32 1.0, %v1135
    %v1137 = vrcp.pop %v1132
    %v1138 = vmul.f32 1.0, %v1137
    %v1139 = vrcp.pop %v1133
    %v1140 = vmul.f32 1.0, %v1139
    %v1141 = vrcp.pop %v1134
    %v1142 = vmul.f32 1.0, %v1141
    %v1143 = vmul.f32 %v1068, %v1136
    %v1144 = vmul.f32 %v1070, %v1138
    %v1145 = vmul.f32 %v1072, %v1140
    %v1146 = vmul.f32 %v1074, %v1142
    %v1147 = vmul.f32 %v1143, %v1111
    %v1148 = vmul.f32 %v1144, %v1113
    %v1149 = vmul.f32 %v1145, %v1115
    %v1150 = vmul.f32 %v1146, %v1117
    %v1151 = vpack.c.bf16 %v1149, %v1147
    %v1152 = vpack.c.bf16 %v1150, %v1148
    %v1153 = vld [vmem:[%s6] sm:$0xf]
    %v1154 = vld [vmem:[%s6 + $0x4] sm:$0xf]
    %v1155 = vld [vmem:[%s6 + $0x8] sm:$0xf]
    %v1156 = vld [vmem:[%s6 + $0xc] sm:$0xf]
    %v1157 = vld [vmem:[%s6 + $0x10] sm:$0xf]
    %v1158 = vld [vmem:[%s6 + $0x14] sm:$0xf]
    %v1159 = vld [vmem:[%s6 + $0x18] sm:$0xf]
    %v1160 = vld [vmem:[%s6 + $0x1c] sm:$0xf]
    %v1161 = vld [vmem:[%s6 + $0x20] sm:$0xf]
    %v1162 = vld [vmem:[%s6 + $0x24] sm:$0xf]
    %v1163 = vld [vmem:[%s6 + $0x28] sm:$0xf]
    %v1164 = vld [vmem:[%s6 + $0x2c] sm:$0xf]
    %v1165 = vld [vmem:[%s6 + $0x30] sm:$0xf]
    %v1166 = vld [vmem:[%s6 + $0x34] sm:$0xf]
    %v1167 = vld [vmem:[%s6 + $0x38] sm:$0xf]
    %v1168 = vld [vmem:[%s6 + $0x3c] sm:$0xf]
    %v1169 = vld [vmem:[%s6 + $0x40] sm:$0xf]
    %v1170 = vld [vmem:[%s6 + $0x44] sm:$0xf]
    %v1171 = vld [vmem:[%s6 + $0x48] sm:$0xf]
    %v1172 = vld [vmem:[%s6 + $0x4c] sm:$0xf]
    %v1173 = vld [vmem:[%s6 + $0x50] sm:$0xf]
    %v1174 = vld [vmem:[%s6 + $0x54] sm:$0xf]
    %v1175 = vld [vmem:[%s6 + $0x58] sm:$0xf]
    %v1176 = vld [vmem:[%s6 + $0x5c] sm:$0xf]
    %v1177 = vld [vmem:[%s6 + $0x60] sm:$0xf]
    %v1178 = vld [vmem:[%s6 + $0x64] sm:$0xf]
    %v1179 = vld [vmem:[%s6 + $0x68] sm:$0xf]
    %v1180 = vld [vmem:[%s6 + $0x6c] sm:$0xf]
    %v1181 = vld [vmem:[%s6 + $0x70] sm:$0xf]
    %v1182 = vld [vmem:[%s6 + $0x74] sm:$0xf]
    %v1183 = vld [vmem:[%s6 + $0x78] sm:$0xf]
    %v1184 = vld [vmem:[%s6 + $0x7c] sm:$0xf]
    %v1217 = vunpack.c.l.b16 %v1153
    %v1218 = vunpack.c.l.b16 %v1154
    %v1219 = vunpack.c.l.b16 %v1155
    %v1220 = vunpack.c.l.b16 %v1156
    %v1221 = vunpack.c.l.b16 %v1157
    %v1222 = vunpack.c.l.b16 %v1158
    %v1223 = vunpack.c.l.b16 %v1159
    %v1224 = vunpack.c.l.b16 %v1160
    %v1225 = vunpack.c.l.b16 %v1161
    %v1226 = vunpack.c.l.b16 %v1162
    %v1227 = vunpack.c.l.b16 %v1163
    %v1228 = vunpack.c.l.b16 %v1164
    %v1229 = vunpack.c.l.b16 %v1165
    %v1230 = vunpack.c.l.b16 %v1166
    %v1231 = vunpack.c.l.b16 %v1167
    %v1232 = vunpack.c.l.b16 %v1168
    %v1233 = vunpack.c.l.b16 %v1169
    %v1234 = vunpack.c.l.b16 %v1170
    %v1235 = vunpack.c.l.b16 %v1171
    %v1236 = vunpack.c.l.b16 %v1172
    %v1237 = vunpack.c.l.b16 %v1173
    %v1238 = vunpack.c.l.b16 %v1174
    %v1239 = vunpack.c.l.b16 %v1175
    %v1240 = vunpack.c.l.b16 %v1176
    %v1241 = vunpack.c.l.b16 %v1177
    %v1242 = vunpack.c.l.b16 %v1178
    %v1243 = vunpack.c.l.b16 %v1179
    %v1244 = vunpack.c.l.b16 %v1180
    %v1245 = vunpack.c.l.b16 %v1181
    %v1246 = vunpack.c.l.b16 %v1182
    %v1247 = vunpack.c.l.b16 %v1183
    %v1248 = vunpack.c.l.b16 %v1184
    %v1249 = vpack.c.b16 %v1218, %v1217
    %v1250 = vpack.c.b16 %v1220, %v1219
    %v1251 = vpack.c.b16 %v1222, %v1221
    %v1252 = vpack.c.b16 %v1224, %v1223
    %v1253 = vpack.c.b16 %v1226, %v1225
    %v1254 = vpack.c.b16 %v1228, %v1227
    %v1255 = vpack.c.b16 %v1230, %v1229
    %v1256 = vpack.c.b16 %v1232, %v1231
    %v1257 = vpack.c.b16 %v1234, %v1233
    %v1258 = vpack.c.b16 %v1236, %v1235
    %v1259 = vpack.c.b16 %v1238, %v1237
    %v1260 = vpack.c.b16 %v1240, %v1239
    %v1261 = vpack.c.b16 %v1242, %v1241
    %v1262 = vpack.c.b16 %v1244, %v1243
    %v1263 = vpack.c.b16 %v1246, %v1245
    %v1264 = vpack.c.b16 %v1248, %v1247
    %1281 = vmatprep.subr.bf16.mxu0 0
    %1282 = vmatpush1.bf16.msra.mxu0 %v1256
    %1283 = vmatprep.subr.bf16.mxu0 0
    %1284 = vmatpush1.bf16.msra.mxu0 %v1255
    %1285 = vmatprep.subr.bf16.mxu0 0
    %1286 = vmatpush1.bf16.msra.mxu0 %v1254
    %1287 = vmatprep.subr.bf16.mxu0 0
    %1288 = vmatpush1.bf16.msra.mxu0 %v1253
    %1289 = vmatprep.subr.bf16.mxu0 0
    %1290 = vmatpush1.bf16.msra.mxu0 %v1252
    %1291 = vmatprep.subr.bf16.mxu0 0
    %1292 = vmatpush1.bf16.msra.mxu0 %v1251
    %1293 = vmatprep.subr.bf16.mxu0 0
    %1294 = vmatpush1.bf16.msra.mxu0 %v1250
    %1295 = vmatprep.subr.bf16.mxu0 0
    %1296 = vmatpush1.bf16.msra.mxu0 %v1249
    %1297 = vmatprep.subr.bf16.mxu0 0
    %1298 = vmatpush2.bf16.msra.mxu0 %v1264
    %1299 = vmatprep.subr.bf16.mxu0 0
    %1300 = vmatpush2.bf16.msra.mxu0 %v1263
    %1301 = vmatprep.subr.bf16.mxu0 0
    %1302 = vmatpush2.bf16.msra.mxu0 %v1262
    %1303 = vmatprep.subr.bf16.mxu0 0
    %1304 = vmatpush2.bf16.msra.mxu0 %v1261
    %1305 = vmatprep.subr.bf16.mxu0 0
    %1306 = vmatpush2.bf16.msra.mxu0 %v1260
    %1307 = vmatprep.subr.bf16.mxu0 0
    %1308 = vmatpush2.bf16.msra.mxu0 %v1259
    %1309 = vmatprep.subr.bf16.mxu0 0
    %1310 = vmatpush2.bf16.msra.mxu0 %v1258
    %1311 = vmatprep.subr.bf16.mxu0 0
    %1312 = vmatpush2.bf16.msra.mxu0 %v1257
    %1313 = vmatprep.mubr.bf16.mxu0 %v1152
    %1314 = vmatmul.mubr.bf16.gmra.mxu0 %v1151
    %v1315 = vpop.f32.mrf.mxu0
    %v1316 = vadd.f32 0.0, %v1315
    %v1317 = vpop.f32.mrf.mxu0
    %v1318 = vpop.f32.mrf.mxu0
    %v1319 = vadd.f32 0.0, %v1318
    %v1320 = vpop.f32.mrf.mxu0
    %1321 = vdwg.mxu0
    %v1322 = vadd.f32 %v906, %v1316
    %v1323 = vadd.f32 %v907, %v1319
    %1324 = vst.msk [vmem:[#allocation8] sm:$0xff] %vm78, %v1322
    %1325 = vst.msk [vmem:[#allocation8 + $0x8] sm:$0xff] %vm78, %v1323
    // Predicated region
    $region54: #{tpu_custom_call.1} parent=1 // pred_check
      _
    $region55: #{tpu_custom_call.1} parent=1 // pred_check_branch
      %1327 = sbr.rel (0) target = $region57
    $region56: #{tpu_custom_call.1} parent=1 // pred_region
      %s1329 = ssub.s32 256, 256
      %1330 = vsyncadd [#allocation4], %s1329
      %s1331 = sshll.u32 [#allocation8], 4
      %s1332 = int_to_ptr.vmem [resolvable:$true] %s1331
      %1337 = dma.vmem_to_hbm [thread:$0]  %s1332, 256, %s10, [#allocation4], 128, 128, 8
    $region57: #{tpu_custom_call.1} parent=1 // pred_fallthru
      _
    // Predicated region
    $region58: #{tpu_custom_call.1} parent=1 // pred_check
      _
    $region59: #{tpu_custom_call.1} parent=1 // pred_check_branch
      %1339 = sbr.rel (0) target = $region61
    $region60: #{tpu_custom_call.1} parent=1 // pred_region
      %1340 = dma.done [#allocation4], 256
    $region61: #{tpu_custom_call.1} parent=1 // pred_fallthru
      _
    %1341 = vsyncpa [#allocation3], 1
    %1342 = vsyncpa [#allocation6], 1
    %1343 = vsyncpa [#allocation4], 1

</llo_original>
